<compile_context>
chip_gen: v5e
topology: v5e:2x2
jax: 0.10.0
libtpu: 0.0.40
codegen_flags: <defaults>
</compile_context>

<pallas_src>
import jax
import jax.numpy as jnp
import numpy as np
from jax import lax
from jax.experimental import pallas as pl
from jax.experimental.pallas import tpu as pltpu


def _round_up(n, m):
    return (n + m - 1) // m * m


def _make_kernel(bb, N, Dq, Dq_pad, heads, dim_head, compute_dtype):
    dh = dim_head

    def kernel(x_ref, wqkv_ref, wo_ref, bo_ref, o_ref):
        # x_ref:    (bb*N, Dq)           compute_dtype
        # wqkv_ref: (Dq, heads*3*dh)     compute_dtype, per-head [q|k|v] column
        #                                groups; softmax scale folded into q
        # wo_ref:   (heads, dh, Dq_pad)  compute_dtype
        # bo_ref:   (1, Dq_pad)          f32
        # o_ref:    (bb, N, Dq_pad)      output dtype
        x = x_ref[...]

        # Fused QKV projection: one MXU matmul, f32 accumulation, one cast.
        qkv = jnp.dot(x, wqkv_ref[...],
                      preferred_element_type=jnp.float32)        # (bb*N, 3*inner)
        qkv = qkv.astype(compute_dtype).reshape(bb, N, heads * 3 * dh)

        # Head-batched operands (heads*bb, N, 3*dh): leading-dim concatenation
        # only (no lane-dim concat). The dh-lane extraction below is the
        # unavoidable layout step of per-head attention with dh < 128.
        qkv_h = jnp.concatenate(
            [qkv[:, :, h * 3 * dh:(h + 1) * 3 * dh] for h in range(heads)],
            axis=0)                                               # (heads*bb, N, 3*dh)
        q = qkv_h[:, :, 0 * dh:1 * dh]
        k = qkv_h[:, :, 1 * dh:2 * dh]
        v = qkv_h[:, :, 2 * dh:3 * dh]

        # ONE batched sim matmul over all (head, batch-row) pairs.
        sim = lax.dot_general(
            q, k, dimension_numbers=(((2,), (2,)), ((0,), (0,))),
            preferred_element_type=jnp.float32)                   # (heads*bb, N, N)

        # Softmax kept in f32 (v5e has no bf16 VPU/EUP); approx recip on EUP.
        sim = sim - jnp.max(sim, axis=-1, keepdims=True)
        p = jnp.exp(sim)
        p = p * pl.reciprocal(jnp.sum(p, axis=-1, keepdims=True), approx=True)

        # ONE batched P @ V matmul.
        out_bh = lax.dot_general(
            p.astype(compute_dtype), v,
            dimension_numbers=(((2,), (1,)), ((0,), (0,))),
            preferred_element_type=jnp.float32)                   # (heads*bb, N, dh)

        # Output projection: head-batched matmul against per-head wo slices,
        # then a leading-dim sum over heads (no lane-dim concatenation).
        out_h = out_bh.reshape(heads, bb * N, dh).astype(compute_dtype)
        proj_h = lax.dot_general(
            out_h, wo_ref[...],
            dimension_numbers=(((2,), (1,)), ((0,), (0,))),
            preferred_element_type=jnp.float32)                   # (heads, bb*N, Dq_pad)
        proj = jnp.sum(proj_h, axis=0) + bo_ref[...]              # (bb*N, Dq_pad)

        o_ref[...] = proj.reshape(bb, N, Dq_pad).astype(o_ref.dtype)

    return kernel


def _vmem_bytes_estimate(bb, N, Dq, Dq_pad, heads, dh, cbytes):
    """Rough per-step VMEM upper bound (lane padding to 128 included)."""
    inner = heads * dh
    rows = bb * N
    lane = lambda n: _round_up(n, 128)
    sub = lambda n: _round_up(max(n, 1), 8)
    est = 0
    est += 2 * sub(rows) * lane(Dq) * cbytes                      # x block (x2 buffers)
    est += 2 * bb * sub(N) * lane(Dq_pad) * 4                     # out block (x2 buffers)
    est += 2 * (sub(Dq) * lane(3 * inner) * cbytes                # fused QKV weight
                + heads * sub(dh) * lane(Dq_pad) * cbytes         # wo
                + sub(1) * lane(Dq_pad) * 4)                      # bias
    est += sub(rows) * lane(3 * inner) * (4 + cbytes)             # qkv f32 + cast
    est += heads * bb * sub(N) * lane(3 * dh) * cbytes            # head-batched qkv
    est += heads * bb * sub(N) * lane(N) * (4 + 4 + cbytes)       # sim, exp, p cast
    est += heads * bb * sub(N) * lane(dh) * (4 + cbytes)          # out_bh + cast
    est += (heads + 1) * sub(rows) * lane(Dq_pad) * 4             # proj parts + sum
    return est


def _pick_batch_block(B, N, Dq, Dq_pad, heads, dh, cbytes, vmem_budget, requested):
    if requested is not None:
        bb = max(1, min(int(requested), B))
        while B % bb:
            bb -= 1
        return bb
    best = 1
    for bb in range(1, B + 1):
        if B % bb:
            continue
        # Keep >= 2 grid steps when B allows: shards the "parallel" axis across
        # v7x's two TensorCores and preserves DMA/compute overlap on all chips.
        if B >= 2 and B // bb < 2:
            continue
        if _vmem_bytes_estimate(bb, N, Dq, Dq_pad, heads, dh, cbytes) <= vmem_budget:
            best = bb
    return best


def entity_cross_attention(x, wq, wk, wv, wo, bo, heads, dim_head, *,
                           compute_dtype=jnp.bfloat16, batch_block=None,
                           vmem_budget_bytes=48 * 1024 * 1024):
    """Self-attention forward of EntityCrossAttention.

    x: (B, N, Dq); wq/wk/wv: (H*dh, Dq); wo: (Dq, H*dh); bo: (Dq,).
    compute_dtype: dtype of MXU operands (bf16 for perf, f32 for exactness);
                   accumulation is always f32; softmax math is always f32.
    """
    B, N, Dq = x.shape
    inner = heads * dim_head
    dh = dim_head
    assert wq.shape == (inner, Dq) and wk.shape == (inner, Dq) and wv.shape == (inner, Dq)
    assert wo.shape == (Dq, inner) and bo.shape == (Dq,)
    scale = dim_head ** (-0.5)
    Dq_pad = _round_up(Dq, 128)   # lane-dense output stores (unmasked vst)

    # ---- host-side layout plumbing (weights prepared once) ------------------
    # Fused QKV weight with per-head [q | k | v] column groups; scale folded
    # into the q columns.
    wq_t = (wq.T.astype(jnp.float32) * scale).reshape(Dq, heads, dh)
    wk_t = wk.T.astype(jnp.float32).reshape(Dq, heads, dh)
    wv_t = wv.T.astype(jnp.float32).reshape(Dq, heads, dh)
    wqkv = jnp.stack([wq_t, wk_t, wv_t], axis=2)                  # (Dq, heads, 3, dh)
    wqkv = wqkv.reshape(Dq, heads * 3 * dh).astype(compute_dtype)

    # Per-head output-projection weight / bias, padded to lane-dense Dq_pad.
    wo_r = wo.T.astype(jnp.float32).reshape(heads, dh, Dq)
    wo_r = jnp.pad(wo_r, ((0, 0), (0, 0), (0, Dq_pad - Dq))).astype(compute_dtype)
    bo_p = jnp.pad(bo.astype(jnp.float32), (0, Dq_pad - Dq)).reshape(1, Dq_pad)

    # x DMA'd in the compute dtype (bf16 on the perf path -> half the HBM bytes).
    x2d = x.reshape(B * N, Dq).astype(compute_dtype)

    # ---- batch blocking: VMEM-budgeted, >= 2 grid steps when possible --------
    cbytes = jnp.dtype(compute_dtype).itemsize
    bb = _pick_batch_block(B, N, Dq, Dq_pad, heads, dh, cbytes,
                           vmem_budget_bytes, batch_block)
    grid = (B // bb,)

    kernel = _make_kernel(bb, N, Dq, Dq_pad, heads, dh, compute_dtype)

    def build(single_buffer_weights):
        def const_spec(shape):
            imap = lambda b, _nd=len(shape): (0,) * _nd
            if single_buffer_weights:
                # Weights never change across grid steps: a second buffer is
                # pure VMEM waste (matters under v7x's 64 MiB ceiling).
                return pl.BlockSpec(shape, imap, pipeline_mode=pl.Buffered(1))
            return pl.BlockSpec(shape, imap)

        grid_spec = pltpu.PrefetchScalarGridSpec(
            num_scalar_prefetch=0,
            grid=grid,
            in_specs=[
                pl.BlockSpec((bb * N, Dq), lambda b: (b, 0)),     # x rows
                const_spec((Dq, heads * 3 * dh)),                 # fused QKV^T
                const_spec((heads, dh, Dq_pad)),                  # wo per head
                const_spec((1, Dq_pad)),                          # bias
            ],
            out_specs=pl.BlockSpec((bb, N, Dq_pad), lambda b: (b, 0, 0)),
        )
        return pl.pallas_call(
            kernel,
            out_shape=jax.ShapeDtypeStruct((B, N, Dq_pad), x.dtype),
            grid_spec=grid_spec,
            compiler_params=pltpu.CompilerParams(
                dimension_semantics=("parallel",),
                vmem_limit_bytes=int(vmem_budget_bytes)),
        )

    try:
        out_pad = build(True)(x2d, wqkv, wo_r, bo_p)
    except Exception:
        # Fallback: let Mosaic choose buffering for the constant operands.
        out_pad = build(False)(x2d, wqkv, wo_r, bo_p)

    return out_pad[:, :, :Dq]


def reference(x, wq, wk, wv, wo, bo, heads, dim_head):
    B, N, Dq = x.shape
    scale = dim_head ** (-0.5)
    q = x @ wq.T
    k = x @ wk.T
    v = x @ wv.T

    def split(t):  # (B, N, H*d) -> (B*H, N, d)
        return (t.reshape(B, N, heads, dim_head)
                  .transpose(0, 2, 1, 3)
                  .reshape(B * heads, N, dim_head))

    q, k, v = map(split, (q, k, v))
    sim = jnp.einsum('bid,bjd->bij', q, k) * scale
    p = jax.nn.softmax(sim, axis=-1)
    out = jnp.einsum('bij,bjd->bid', p, v)
    out = (out.reshape(B, heads, N, dim_head)
              .transpose(0, 2, 1, 3)
              .reshape(B, N, heads * dim_head))
    return out @ wo.T + bo


if __name__ == "__main__":
    # small shapes consistent with the module
    B, N, Dq = 2, 16, 32
    heads, dim_head = 4, 16
    inner_dim = heads * dim_head

    key = jax.random.PRNGKey(0)
    k_x, k_q, k_k, k_v, k_o, k_b = jax.random.split(key, 6)

    x = jax.random.normal(k_x, (B, N, Dq), dtype=jnp.float32)
    # deterministic "Linear"-style init (uniform in +/- 1/sqrt(fan_in))
    bq = 1.0 / np.sqrt(Dq)
    bi = 1.0 / np.sqrt(inner_dim)
    wq = jax.random.uniform(k_q, (inner_dim, Dq), minval=-bq, maxval=bq, dtype=jnp.float32)
    wk = jax.random.uniform(k_k, (inner_dim, Dq), minval=-bq, maxval=bq, dtype=jnp.float32)
    wv = jax.random.uniform(k_v, (inner_dim, Dq), minval=-bq, maxval=bq, dtype=jnp.float32)
    wo = jax.random.uniform(k_o, (Dq, inner_dim), minval=-bi, maxval=bi, dtype=jnp.float32)
    bo = jax.random.uniform(k_b, (Dq,), minval=-bi, maxval=bi, dtype=jnp.float32)

    ref = reference(x, wq, wk, wv, wo, bo, heads, dim_head)

    # f32-operand path: tight check (approx reciprocal only deviation).
    out_f32 = entity_cross_attention(x, wq, wk, wv, wo, bo, heads, dim_head,
                                     compute_dtype=jnp.float32)
    out_f32 = jax.block_until_ready(out_f32)
    np.testing.assert_allclose(np.asarray(out_f32), np.asarray(ref),
                               rtol=2e-3, atol=2e-3)

    # bf16-operand perf path (f32 accumulation, f32 softmax): looser tolerance.
    out_bf16 = entity_cross_attention(x, wq, wk, wv, wo, bo, heads, dim_head,
                                      compute_dtype=jnp.bfloat16)
    out_bf16 = jax.block_until_ready(out_bf16)
    np.testing.assert_allclose(np.asarray(out_bf16), np.asarray(ref),
                               rtol=5e-2, atol=5e-2)

    print("KERNEL_OK")
</pallas_src>

<mosaic_0001>
module attributes {stable_mosaic.version = 11 : i64} {
  func.func @kernel(%arg0: i32, %arg1: memref<16x32xf32, #tpu.memory_space<vmem>>, %arg2: memref<32x192xf32, #tpu.memory_space<vmem>>, %arg3: memref<4x16x128xf32, #tpu.memory_space<vmem>>, %arg4: memref<1x128xf32, #tpu.memory_space<vmem>>, %arg5: memref<1x16x128xf32, #tpu.memory_space<vmem>>) attributes {dimension_semantics = [#tpu.dimension_semantics<parallel>], iteration_bounds = array<i64: 2>, scalar_prefetch = 0 : i64, scratch_operands = 0 : i64, tpu.core_type = #tpu.core_type<tc>, window_params = [{transform_indices = @transform_0, window_bounds = array<i64: 16, 32>}, {pipeline_mode = #tpu.pipeline_mode<synchronous>, transform_indices = @transform_1, window_bounds = array<i64: 32, 192>}, {pipeline_mode = #tpu.pipeline_mode<synchronous>, transform_indices = @transform_2, window_bounds = array<i64: 4, 16, 128>}, {pipeline_mode = #tpu.pipeline_mode<synchronous>, transform_indices = @transform_3, window_bounds = array<i64: 1, 128>}, {transform_indices = @transform_4, window_bounds = array<i64: 1, 16, 128>}]} {
    %c0 = arith.constant 0 : index
    %c0_0 = arith.constant 0 : index
    %0 = vector.load %arg1[%c0, %c0_0] : memref<16x32xf32, #tpu.memory_space<vmem>>, vector<16x32xf32>
    %c0_1 = arith.constant 0 : index
    %c0_2 = arith.constant 0 : index
    %1 = vector.load %arg2[%c0_1, %c0_2] : memref<32x192xf32, #tpu.memory_space<vmem>>, vector<32x192xf32>
    %cst = arith.constant dense<0.000000e+00> : vector<16x192xf32>
    %2 = tpu.matmul %0, %1, %cst {dimension_numbers = #tpu.dot_dimension_numbers<[1], [0], [0], [1], [0, 0, 1, 1], [], []>} : vector<16x32xf32>, vector<32x192xf32>, vector<16x192xf32> -> vector<16x192xf32>
    %3 = vector.shape_cast %2 : vector<16x192xf32> to vector<1x16x192xf32>
    %4 = vector.extract_strided_slice %3 {offsets = [0, 0, 0], sizes = [1, 16, 48], strides = [1, 1, 1]} : vector<1x16x192xf32> to vector<1x16x48xf32>
    %5 = vector.extract_strided_slice %3 {offsets = [0, 0, 48], sizes = [1, 16, 48], strides = [1, 1, 1]} : vector<1x16x192xf32> to vector<1x16x48xf32>
    %6 = vector.extract_strided_slice %3 {offsets = [0, 0, 96], sizes = [1, 16, 48], strides = [1, 1, 1]} : vector<1x16x192xf32> to vector<1x16x48xf32>
    %7 = vector.extract_strided_slice %3 {offsets = [0, 0, 144], sizes = [1, 16, 48], strides = [1, 1, 1]} : vector<1x16x192xf32> to vector<1x16x48xf32>
    %8 = tpu.concatenate %4, %5, %6, %7 in 0 : vector<1x16x48xf32>, vector<1x16x48xf32>, vector<1x16x48xf32>, vector<1x16x48xf32> -> vector<4x16x48xf32>
    %9 = vector.extract_strided_slice %8 {offsets = [0, 0, 0], sizes = [4, 16, 16], strides = [1, 1, 1]} : vector<4x16x48xf32> to vector<4x16x16xf32>
    %10 = vector.extract_strided_slice %8 {offsets = [0, 0, 16], sizes = [4, 16, 16], strides = [1, 1, 1]} : vector<4x16x48xf32> to vector<4x16x16xf32>
    %11 = vector.extract_strided_slice %8 {offsets = [0, 0, 32], sizes = [4, 16, 16], strides = [1, 1, 1]} : vector<4x16x48xf32> to vector<4x16x16xf32>
    %cst_3 = arith.constant dense<0.000000e+00> : vector<4x16x16xf32>
    %12 = tpu.matmul %9, %10, %cst_3 {dimension_numbers = #tpu.dot_dimension_numbers<[2], [2], [1], [1], [0, 0, 0, 1, 1, 1], [0], [0]>} : vector<4x16x16xf32>, vector<4x16x16xf32>, vector<4x16x16xf32> -> vector<4x16x16xf32>
    %cst_4 = arith.constant dense<0xFF800000> : vector<4x16xf32>
    %13 = vector.multi_reduction <maximumf>, %12, %cst_4 [2] : vector<4x16x16xf32> to vector<4x16xf32>
    %14 = vector.shape_cast %13 : vector<4x16xf32> to vector<4x16x1xf32>
    %15 = vector.broadcast %14 : vector<4x16x1xf32> to vector<4x16x16xf32>
    %16 = arith.subf %12, %15 : vector<4x16x16xf32>
    %17 = math.exp %16 : vector<4x16x16xf32>
    %cst_5 = arith.constant dense<0.000000e+00> : vector<4x16xf32>
    %18 = vector.multi_reduction <add>, %17, %cst_5 [2] : vector<4x16x16xf32> to vector<4x16xf32>
    %19 = vector.shape_cast %18 : vector<4x16xf32> to vector<4x16x1xf32>
    %20 = tpu.reciprocal %19 {approx = true} : vector<4x16x1xf32> -> vector<4x16x1xf32>
    %21 = vector.broadcast %20 : vector<4x16x1xf32> to vector<4x16x16xf32>
    %22 = arith.mulf %17, %21 : vector<4x16x16xf32>
    %cst_6 = arith.constant dense<0.000000e+00> : vector<4x16x16xf32>
    %23 = tpu.matmul %22, %11, %cst_6 {dimension_numbers = #tpu.dot_dimension_numbers<[2], [1], [1], [2], [0, 0, 0, 1, 1, 2], [0], [0]>} : vector<4x16x16xf32>, vector<4x16x16xf32>, vector<4x16x16xf32> -> vector<4x16x16xf32>
    %c0_7 = arith.constant 0 : index
    %c0_8 = arith.constant 0 : index
    %c0_9 = arith.constant 0 : index
    %24 = vector.load %arg3[%c0_7, %c0_8, %c0_9] : memref<4x16x128xf32, #tpu.memory_space<vmem>>, vector<4x16x128xf32>
    %cst_10 = arith.constant dense<0.000000e+00> : vector<4x16x128xf32>
    %25 = tpu.matmul %23, %24, %cst_10 {dimension_numbers = #tpu.dot_dimension_numbers<[2], [1], [1], [2], [0, 0, 0, 1, 1, 2], [0], [0]>} : vector<4x16x16xf32>, vector<4x16x128xf32>, vector<4x16x128xf32> -> vector<4x16x128xf32>
    %cst_11 = arith.constant dense<0.000000e+00> : vector<16x128xf32>
    %26 = vector.multi_reduction <add>, %25, %cst_11 [0] : vector<4x16x128xf32> to vector<16x128xf32>
    %c0_12 = arith.constant 0 : index
    %c0_13 = arith.constant 0 : index
    %27 = vector.load %arg4[%c0_12, %c0_13] : memref<1x128xf32, #tpu.memory_space<vmem>>, vector<1x128xf32>
    %28 = vector.broadcast %27 : vector<1x128xf32> to vector<16x128xf32>
    %29 = arith.addf %26, %28 : vector<16x128xf32>
    %30 = vector.shape_cast %29 : vector<16x128xf32> to vector<1x16x128xf32>
    %c0_14 = arith.constant 0 : index
    %c0_15 = arith.constant 0 : index
    %c0_16 = arith.constant 0 : index
    %31 = vector.load %arg5[%c0_14, %c0_15, %c0_16] : memref<1x16x128xf32, #tpu.memory_space<vmem>>, vector<1x16x128xf32>
    tpu.vector_store %arg5[%c0_14, %c0_15, %c0_16], %30 {strides = array<i32>} : memref<1x16x128xf32, #tpu.memory_space<vmem>>, vector<1x16x128xf32>,
    return
  }
  func.func @transform_0(%arg0: i32) -> (i32, i32) {
    %c0_i32 = arith.constant 0 : i32
    %c0_i32_0 = arith.constant 0 : i32
    return %arg0, %c0_i32 : i32, i32
  }
  func.func @transform_1(%arg0: i32) -> (i32, i32) {
    %c0_i32 = arith.constant 0 : i32
    %c0_i32_0 = arith.constant 0 : i32
    %c0_i32_1 = arith.constant 0 : i32
    return %c0_i32, %c0_i32_0 : i32, i32
  }
  func.func @transform_2(%arg0: i32) -> (i32, i32, i32) {
    %c0_i32 = arith.constant 0 : i32
    %c0_i32_0 = arith.constant 0 : i32
    %c0_i32_1 = arith.constant 0 : i32
    %c0_i32_2 = arith.constant 0 : i32
    return %c0_i32, %c0_i32_0, %c0_i32_1 : i32, i32, i32
  }
  func.func @transform_3(%arg0: i32) -> (i32, i32) {
    %c0_i32 = arith.constant 0 : i32
    %c0_i32_0 = arith.constant 0 : i32
    %c0_i32_1 = arith.constant 0 : i32
    return %c0_i32, %c0_i32_0 : i32, i32
  }
  func.func @transform_4(%arg0: i32) -> (i32, i32, i32) {
    %c0_i32 = arith.constant 0 : i32
    %c0_i32_0 = arith.constant 0 : i32
    %c0_i32_1 = arith.constant 0 : i32
    return %arg0, %c0_i32, %c0_i32_0 : i32, i32, i32
  }
}

module attributes {stable_mosaic.version = 11 : i64} {
  func.func @kernel(%arg0: i32, %arg1: memref<16x32xf32, #tpu.memory_space<vmem>>, %arg2: memref<32x192xf32, #tpu.memory_space<vmem>>, %arg3: memref<4x16x128xf32, #tpu.memory_space<vmem>>, %arg4: memref<1x128xf32, #tpu.memory_space<vmem>>, %arg5: memref<1x16x128xf32, #tpu.memory_space<vmem>>) attributes {dimension_semantics = [#tpu.dimension_semantics<parallel>], iteration_bounds = array<i64: 2>, scalar_prefetch = 0 : i64, scratch_operands = 0 : i64, tpu.core_type = #tpu.core_type<tc>, window_params = [{transform_indices = @transform_0, window_bounds = array<i64: 16, 32>}, {pipeline_mode = #tpu.pipeline_mode<synchronous>, transform_indices = @transform_1, window_bounds = array<i64: 32, 192>}, {pipeline_mode = #tpu.pipeline_mode<synchronous>, transform_indices = @transform_2, window_bounds = array<i64: 4, 16, 128>}, {pipeline_mode = #tpu.pipeline_mode<synchronous>, transform_indices = @transform_3, window_bounds = array<i64: 1, 128>}, {transform_indices = @transform_4, window_bounds = array<i64: 1, 16, 128>}]} {
    %c0 = arith.constant 0 : index
    %c0_0 = arith.constant 0 : index
    %0 = vector.load %arg1[%c0, %c0_0] : memref<16x32xf32, #tpu.memory_space<vmem>>, vector<16x32xf32>
    %c0_1 = arith.constant 0 : index
    %c0_2 = arith.constant 0 : index
    %1 = vector.load %arg2[%c0_1, %c0_2] : memref<32x192xf32, #tpu.memory_space<vmem>>, vector<32x192xf32>
    %cst = arith.constant dense<0.000000e+00> : vector<16x192xf32>
    %2 = tpu.matmul %0, %1, %cst {dimension_numbers = #tpu.dot_dimension_numbers<[1], [0], [0], [1], [0, 0, 1, 1], [], []>} : vector<16x32xf32>, vector<32x192xf32>, vector<16x192xf32> -> vector<16x192xf32>
    %3 = vector.shape_cast %2 : vector<16x192xf32> to vector<1x16x192xf32>
    %4 = vector.extract_strided_slice %3 {offsets = [0, 0, 0], sizes = [1, 16, 48], strides = [1, 1, 1]} : vector<1x16x192xf32> to vector<1x16x48xf32>
    %5 = vector.extract_strided_slice %3 {offsets = [0, 0, 48], sizes = [1, 16, 48], strides = [1, 1, 1]} : vector<1x16x192xf32> to vector<1x16x48xf32>
    %6 = vector.extract_strided_slice %3 {offsets = [0, 0, 96], sizes = [1, 16, 48], strides = [1, 1, 1]} : vector<1x16x192xf32> to vector<1x16x48xf32>
    %7 = vector.extract_strided_slice %3 {offsets = [0, 0, 144], sizes = [1, 16, 48], strides = [1, 1, 1]} : vector<1x16x192xf32> to vector<1x16x48xf32>
    %8 = tpu.concatenate %4, %5, %6, %7 in 0 : vector<1x16x48xf32>, vector<1x16x48xf32>, vector<1x16x48xf32>, vector<1x16x48xf32> -> vector<4x16x48xf32>
    %9 = vector.extract_strided_slice %8 {offsets = [0, 0, 0], sizes = [4, 16, 16], strides = [1, 1, 1]} : vector<4x16x48xf32> to vector<4x16x16xf32>
    %10 = vector.extract_strided_slice %8 {offsets = [0, 0, 16], sizes = [4, 16, 16], strides = [1, 1, 1]} : vector<4x16x48xf32> to vector<4x16x16xf32>
    %11 = vector.extract_strided_slice %8 {offsets = [0, 0, 32], sizes = [4, 16, 16], strides = [1, 1, 1]} : vector<4x16x48xf32> to vector<4x16x16xf32>
    %cst_3 = arith.constant dense<0.000000e+00> : vector<4x16x16xf32>
    %12 = tpu.matmul %9, %10, %cst_3 {dimension_numbers = #tpu.dot_dimension_numbers<[2], [2], [1], [1], [0, 0, 0, 1, 1, 1], [0], [0]>} : vector<4x16x16xf32>, vector<4x16x16xf32>, vector<4x16x16xf32> -> vector<4x16x16xf32>
    %cst_4 = arith.constant dense<0xFF800000> : vector<4x16xf32>
    %13 = vector.multi_reduction <maximumf>, %12, %cst_4 [2] : vector<4x16x16xf32> to vector<4x16xf32>
    %14 = vector.shape_cast %13 : vector<4x16xf32> to vector<4x16x1xf32>
    %15 = vector.broadcast %14 : vector<4x16x1xf32> to vector<4x16x16xf32>
    %16 = arith.subf %12, %15 : vector<4x16x16xf32>
    %17 = math.exp %16 : vector<4x16x16xf32>
    %cst_5 = arith.constant dense<0.000000e+00> : vector<4x16xf32>
    %18 = vector.multi_reduction <add>, %17, %cst_5 [2] : vector<4x16x16xf32> to vector<4x16xf32>
    %19 = vector.shape_cast %18 : vector<4x16xf32> to vector<4x16x1xf32>
    %20 = tpu.reciprocal %19 {approx = true} : vector<4x16x1xf32> -> vector<4x16x1xf32>
    %21 = vector.broadcast %20 : vector<4x16x1xf32> to vector<4x16x16xf32>
    %22 = arith.mulf %17, %21 : vector<4x16x16xf32>
    %cst_6 = arith.constant dense<0.000000e+00> : vector<4x16x16xf32>
    %23 = tpu.matmul %22, %11, %cst_6 {dimension_numbers = #tpu.dot_dimension_numbers<[2], [1], [1], [2], [0, 0, 0, 1, 1, 2], [0], [0]>} : vector<4x16x16xf32>, vector<4x16x16xf32>, vector<4x16x16xf32> -> vector<4x16x16xf32>
    %c0_7 = arith.constant 0 : index
    %c0_8 = arith.constant 0 : index
    %c0_9 = arith.constant 0 : index
    %24 = vector.load %arg3[%c0_7, %c0_8, %c0_9] : memref<4x16x128xf32, #tpu.memory_space<vmem>>, vector<4x16x128xf32>
    %cst_10 = arith.constant dense<0.000000e+00> : vector<4x16x128xf32>
    %25 = tpu.matmul %23, %24, %cst_10 {dimension_numbers = #tpu.dot_dimension_numbers<[2], [1], [1], [2], [0, 0, 0, 1, 1, 2], [0], [0]>} : vector<4x16x16xf32>, vector<4x16x128xf32>, vector<4x16x128xf32> -> vector<4x16x128xf32>
    %cst_11 = arith.constant dense<0.000000e+00> : vector<16x128xf32>
    %26 = vector.multi_reduction <add>, %25, %cst_11 [0] : vector<4x16x128xf32> to vector<16x128xf32>
    %c0_12 = arith.constant 0 : index
    %c0_13 = arith.constant 0 : index
    %27 = vector.load %arg4[%c0_12, %c0_13] : memref<1x128xf32, #tpu.memory_space<vmem>>, vector<1x128xf32>
    %28 = vector.broadcast %27 : vector<1x128xf32> to vector<16x128xf32>
    %29 = arith.addf %26, %28 : vector<16x128xf32>
    %30 = vector.shape_cast %29 : vector<16x128xf32> to vector<1x16x128xf32>
    %c0_14 = arith.constant 0 : index
    %c0_15 = arith.constant 0 : index
    %c0_16 = arith.constant 0 : index
    %31 = vector.load %arg5[%c0_14, %c0_15, %c0_16] : memref<1x16x128xf32, #tpu.memory_space<vmem>>, vector<1x16x128xf32>
    tpu.vector_store %arg5[%c0_14, %c0_15, %c0_16], %30 {strides = array<i32>} : memref<1x16x128xf32, #tpu.memory_space<vmem>>, vector<1x16x128xf32>,
    return
  }
  func.func @transform_0(%arg0: i32) -> (i32, i32) {
    %c0_i32 = arith.constant 0 : i32
    %c0_i32_0 = arith.constant 0 : i32
    return %arg0, %c0_i32 : i32, i32
  }
  func.func @transform_1(%arg0: i32) -> (i32, i32) {
    %c0_i32 = arith.constant 0 : i32
    %c0_i32_0 = arith.constant 0 : i32
    %c0_i32_1 = arith.constant 0 : i32
    return %c0_i32, %c0_i32_0 : i32, i32
  }
  func.func @transform_2(%arg0: i32) -> (i32, i32, i32) {
    %c0_i32 = arith.constant 0 : i32
    %c0_i32_0 = arith.constant 0 : i32
    %c0_i32_1 = arith.constant 0 : i32
    %c0_i32_2 = arith.constant 0 : i32
    return %c0_i32, %c0_i32_0, %c0_i32_1 : i32, i32, i32
  }
  func.func @transform_3(%arg0: i32) -> (i32, i32) {
    %c0_i32 = arith.constant 0 : i32
    %c0_i32_0 = arith.constant 0 : i32
    %c0_i32_1 = arith.constant 0 : i32
    return %c0_i32, %c0_i32_0 : i32, i32
  }
  func.func @transform_4(%arg0: i32) -> (i32, i32, i32) {
    %c0_i32 = arith.constant 0 : i32
    %c0_i32_0 = arith.constant 0 : i32
    %c0_i32_1 = arith.constant 0 : i32
    return %arg0, %c0_i32, %c0_i32_0 : i32, i32, i32
  }
}

</mosaic_0001>

<llo_original>
// kernel: tpu_custom_call.1
$region0: #{tpu_custom_call.1}
  #allocation0 [shape = 'u32[]', space=smem, size = 0x4, offset = 0x4, fixed_abs, tag = 'smem constant byte address 0x4 - core index']
  #allocation1 [shape = 'u32[72,128]{1,0:T(1,128)}', space=vmem, size = 0x9000, scoped, tag = 'internal scratch']
  %s0 = inlined_call_operand.hbm [shape: f32[32,32], index: 0, kind: input, shape index: {}]
  %s1 = inlined_call_operand.hbm [shape: f32[32,192], index: 1, kind: input, shape index: {}]
  %s2 = inlined_call_operand.hbm [shape: f32[4,16,128], index: 2, kind: input, shape index: {}]
  %s3 = inlined_call_operand.vmem [shape: f32[1,128], index: 3, kind: input, shape index: {}]
  %s4 = inlined_call_operand.hbm [shape: f32[2,16,128], index: 4, kind: output, shape index: {}]
  %s5 = sld [smem:[#allocation0]]
  $region61: #{tpu_custom_call.1} parent=0
    _
  %s7 = ssub.s32 1, %s5
  %s8 = scalar_select 0, %s7, %s5
  $region1: #{tpu_custom_call.1} parent=0
    #allocation2 [shape = 'u8[16384]{0}', space=vmem, size = 0x4000, scoped, tag = 'input window, operand 0']
    #allocation3 [shape = 's32[2]{0}', space=sflag, size = 0x8, scoped, tag = 'scoped memory for tpu_custom_call.1']
    #allocation4 [shape = 's32[2]{0}', space=sflag, size = 0x8, scoped, tag = 'scoped memory for tpu_custom_call.1']
    #allocation5 [shape = 'u8[32768]{0}', space=vmem, size = 0x8000, scoped, tag = 'input window, operand 1, single buffered']
    #allocation6 [shape = 's32[1]{0}', space=sflag, size = 0x4, scoped, tag = 'scoped memory for tpu_custom_call.1']
    #allocation7 [shape = 'u8[32768]{0}', space=vmem, size = 0x8000, scoped, tag = 'input window, operand 2, single buffered']
    #allocation8 [shape = 'u8[16384]{0}', space=vmem, size = 0x4000, scoped, tag = 'output window, operand 0']
    %9 = vsyncpa [#allocation3], 0
    %s10 = scalar_lea.sflag [#allocation3], 1
    %11 = vsyncpa %s10, 0
    %12 = vsyncpa [#allocation6], 0
    %13 = vsyncpa [#allocation4], 0
    %s14 = scalar_lea.sflag [#allocation4], 1
    %15 = vsyncpa %s14, 0
    loop: start=0, step=1, limit=4
    $region2: #{tpu_custom_call.1} parent=1 // loop_pre_header
      _
    $region3: #{tpu_custom_call.1} parent=1 // loop_header
      %s17 = sphi 0, %s21
      %p18 = scmp.ge.s32.totalorder %s17, 4
      %s27 = sphi 0, %s29
      %s30 = sphi 0, %s27
      %s31 = sphi 0, %s30
      %s47 = sphi 0, %s31
      %s51 = sphi 0, %s51
      %s53 = sphi 0, %s51
      %s54 = sphi 0, %s53
      %s68 = sphi 0, %s54
      %s72 = sphi 0, %s72
      %s74 = sphi 0, %s72
      %s75 = sphi 0, %s74
      %s89 = sphi 0, %s75
      %s93 = sphi 0, %s93
      %s95 = sphi 0, %s93
      %s96 = sphi 0, %s95
      %s110 = sphi 0, %s96
      %s116 = sphi 0, %s118
      %s119 = sphi 0, %s116
      %s120 = sphi 0, %s119
      %s136 = sphi 0, %s120
    $region4: #{tpu_custom_call.1} parent=1 // loop_header_branch
      %20 = sbr.rel (%p18) target = $region8
    $region5: #{tpu_custom_call.1} parent=1 // loop_body
      %s22 = ssub.s32 %s17, 1
      %s23 = ssub.s32 %s17, 2
      %s24 = sadd.s32 %s17, 1
      %s25 = ssub.s32 %s17, %s24
      %p26 = scmp.eq.s32.totalorder %s25, 0
      %s28 = sadd.s32 %s27, 1
      %s29 = scalar_select %p26, %s27, %s28
      %p32 = pneg %p26
      %p33 = scmp.eq.s32.totalorder %s17, 1
      %p34 = por %p32, %p33
      %p35 = scmp.ne.s32.totalorder %s27, %s30
      %p36 = scmp.eq.s32.totalorder %s17, 0
      %p37 = por %p35, %p36
      %p38 = scmp.ne.s32.totalorder %s27, %s30
      %p39 = scmp.eq.s32.totalorder %s22, 1
      %p40 = por %p38, %p39
      %p41 = scmp.ne.s32.totalorder %s30, %s31
      %p42 = scmp.eq.s32.totalorder %s22, 0
      %p43 = por %p41, %p42
      %p44 = scmp.ne.s32.totalorder %s30, %s31
      %p45 = scmp.eq.s32.totalorder %s23, 1
      %p46 = por %p44, %p45
      %p48 = scmp.ne.s32.totalorder %s31, %s47
      %p49 = scmp.eq.s32.totalorder %s23, 0
      %p50 = por %p48, %p49
      %s52 = sadd.s32 %s51, 1
      %p55 = scmp.eq.s32.totalorder %s17, 1
      %p56 = scmp.ne.s32.totalorder %s51, %s53
      %p57 = scmp.eq.s32.totalorder %s17, 0
      %p58 = por %p56, %p57
      %p59 = scmp.ne.s32.totalorder %s51, %s53
      %p60 = scmp.eq.s32.totalorder %s22, 1
      %p61 = por %p59, %p60
      %p62 = scmp.ne.s32.totalorder %s53, %s54
      %p63 = scmp.eq.s32.totalorder %s22, 0
      %p64 = por %p62, %p63
      %p65 = scmp.ne.s32.totalorder %s53, %s54
      %p66 = scmp.eq.s32.totalorder %s23, 1
      %p67 = por %p65, %p66
      %p69 = scmp.ne.s32.totalorder %s54, %s68
      %p70 = scmp.eq.s32.totalorder %s23, 0
      %p71 = por %p69, %p70
      %s73 = sadd.s32 %s72, 1
      %p76 = scmp.eq.s32.totalorder %s17, 1
      %p77 = scmp.ne.s32.totalorder %s72, %s74
      %p78 = scmp.eq.s32.totalorder %s17, 0
      %p79 = por %p77, %p78
      %p80 = scmp.ne.s32.totalorder %s72, %s74
      %p81 = scmp.eq.s32.totalorder %s22, 1
      %p82 = por %p80, %p81
      %p83 = scmp.ne.s32.totalorder %s74, %s75
      %p84 = scmp.eq.s32.totalorder %s22, 0
      %p85 = por %p83, %p84
      %p86 = scmp.ne.s32.totalorder %s74, %s75
      %p87 = scmp.eq.s32.totalorder %s23, 1
      %p88 = por %p86, %p87
      %p90 = scmp.ne.s32.totalorder %s75, %s89
      %p91 = scmp.eq.s32.totalorder %s23, 0
      %p92 = por %p90, %p91
      %s94 = sadd.s32 %s93, 1
      %p97 = scmp.eq.s32.totalorder %s17, 1
      %p98 = scmp.ne.s32.totalorder %s93, %s95
      %p99 = scmp.eq.s32.totalorder %s17, 0
      %p100 = por %p98, %p99
      %p101 = scmp.ne.s32.totalorder %s93, %s95
      %p102 = scmp.eq.s32.totalorder %s22, 1
      %p103 = por %p101, %p102
      %p104 = scmp.ne.s32.totalorder %s95, %s96
      %p105 = scmp.eq.s32.totalorder %s22, 0
      %p106 = por %p104, %p105
      %p107 = scmp.ne.s32.totalorder %s95, %s96
      %p108 = scmp.eq.s32.totalorder %s23, 1
      %p109 = por %p107, %p108
      %p111 = scmp.ne.s32.totalorder %s96, %s110
      %p112 = scmp.eq.s32.totalorder %s23, 0
      %p113 = por %p111, %p112
      %s114 = ssub.s32 %s17, %s24
      %p115 = scmp.eq.s32.totalorder %s114, 0
      %s117 = sadd.s32 %s116, 1
      %s118 = scalar_select %p115, %s116, %s117
      %p121 = pneg %p115
      %p122 = scmp.eq.s32.totalorder %s17, 1
      %p123 = por %p121, %p122
      %p124 = scmp.ne.s32.totalorder %s116, %s119
      %p125 = scmp.eq.s32.totalorder %s17, 0
      %p126 = por %p124, %p125
      %p127 = scmp.ne.s32.totalorder %s116, %s119
      %p128 = scmp.eq.s32.totalorder %s22, 1
      %p129 = por %p127, %p128
      %p130 = scmp.ne.s32.totalorder %s119, %s120
      %p131 = scmp.eq.s32.totalorder %s22, 0
      %p132 = por %p130, %p131
      %p133 = scmp.ne.s32.totalorder %s119, %s120
      %p134 = scmp.eq.s32.totalorder %s23, 1
      %p135 = por %p133, %p134
      %p137 = scmp.ne.s32.totalorder %s120, %s136
      %p138 = scmp.eq.s32.totalorder %s23, 0
      %p139 = por %p137, %p138
      %p140 = scmp.le.s32.totalorder 1, %s17
      %p141 = scmp.lt.s32.totalorder %s17, 3
      %p142 = pnand %p140, %p141
      %p143 = pneg %p142
      // Predicated region
      $region9: #{tpu_custom_call.1} parent=5 // pred_check
        _
      $region10: #{tpu_custom_call.1} parent=5 // pred_check_branch
        %145 = sbr.rel (%p142) target = $region12
      $region11: #{tpu_custom_call.1} parent=5 // pred_region
        %s146 = ssub.s32 %s17, 1
        // Predicated region
        $region13: #{tpu_custom_call.1} parent=11 // pred_check
          %p147 = pneg %p64
        $region14: #{tpu_custom_call.1} parent=11 // pred_check_branch
          %149 = sbr.rel (%p147) target = $region16
        $region15: #{tpu_custom_call.1} parent=11 // pred_region
          %151 = vsyncadd [#allocation6], 0
          %s152 = sshll.u32 %s1, 4
          %s153 = int_to_ptr.hbm [resolvable:$true] %s152
          %s154 = sshll.u32 [#allocation5], 4
          %s155 = int_to_ptr.vmem [resolvable:$true] %s154
          %160 = dma.hbm_to_vmem [thread:$0]  %s153, 1024, %s155, [#allocation6], 256, 256, 16
        $region16: #{tpu_custom_call.1} parent=11 // pred_fallthru
          _
        // Predicated region
        $region17: #{tpu_custom_call.1} parent=11 // pred_check
          %p161 = pneg %p85
        $region18: #{tpu_custom_call.1} parent=11 // pred_check_branch
          %163 = sbr.rel (%p161) target = $region20
        $region19: #{tpu_custom_call.1} parent=11 // pred_region
          %165 = vsyncadd [#allocation6], 0
          %s166 = sshll.u32 %s2, 4
          %s167 = int_to_ptr.hbm [resolvable:$true] %s166
          %s168 = sshll.u32 [#allocation7], 4
          %s169 = int_to_ptr.vmem [resolvable:$true] %s168
          %174 = dma.hbm_to_vmem [thread:$0]  %s167, 1024, %s169, [#allocation6], 128, 128, 8
        $region20: #{tpu_custom_call.1} parent=11 // pred_fallthru
          _
        // Predicated region
        $region21: #{tpu_custom_call.1} parent=11 // pred_check
          %p175 = pneg %p106
        $region22: #{tpu_custom_call.1} parent=11 // pred_check_branch
          %177 = sbr.rel (%p175) target = $region24
        $region23: #{tpu_custom_call.1} parent=11 // pred_region
          _
        $region24: #{tpu_custom_call.1} parent=11 // pred_fallthru
          _
      $region12: #{tpu_custom_call.1} parent=5 // pred_fallthru
        _
      %p178 = scmp.lt.s32.totalorder %s17, 2
      // Predicated region
      $region25: #{tpu_custom_call.1} parent=5 // pred_check
        %p179 = pneg %p178
      $region26: #{tpu_custom_call.1} parent=5 // pred_check_branch
        %181 = sbr.rel (%p179) target = $region28
      $region27: #{tpu_custom_call.1} parent=5 // pred_region
        // Predicated region
        $region29: #{tpu_custom_call.1} parent=27 // pred_check
          %p182 = pneg %p37
        $region30: #{tpu_custom_call.1} parent=27 // pred_check_branch
          %184 = sbr.rel (%p182) target = $region32
        $region31: #{tpu_custom_call.1} parent=27 // pred_region
          %s185 = sand.u32 %s27, 1
          %s186 = scalar_lea.sflag [#allocation3], %s185
          %s187 = sand.u32 %s27, 1
          %s188 = smul.addr %s187, 16
          %s189 = scalar_lea.vmem [#allocation2], %s188
          %s190 = smul.u32 2, %s17
          %192 = vsyncadd %s186, 0
          %s193 = smul.addr %s190, 8
          %s194 = scalar_lea.hbm %s0, %s193
          %s195 = sshll.u32 %s194, 4
          %s196 = int_to_ptr.hbm [resolvable:$true] %s195
          %s197 = sshll.u32 %s189, 4
          %s198 = int_to_ptr.vmem [resolvable:$true] %s197
          %203 = dma.hbm_to_vmem [thread:$0]  %s196, 256, %s198, %s186, 128, 128, 8
        $region32: #{tpu_custom_call.1} parent=27 // pred_fallthru
          _
      $region28: #{tpu_custom_call.1} parent=5 // pred_fallthru
        _
      %p204 = scmp.le.s32.totalorder 1, %s17
      %p205 = scmp.lt.s32.totalorder %s17, 3
      %p206 = pnand %p204, %p205
      %p207 = pneg %p206
      // Predicated region
      $region33: #{tpu_custom_call.1} parent=5 // pred_check
        _
      $region34: #{tpu_custom_call.1} parent=5 // pred_check_branch
        %209 = sbr.rel (%p206) target = $region36
      $region35: #{tpu_custom_call.1} parent=5 // pred_region
        %s210 = ssub.s32 %s17, 1
        %s211 = sand.u32 %s30, 1
        %s212 = scalar_lea.sflag [#allocation3], %s211
        %s213 = sand.u32 %s30, 1
        %s214 = smul.addr %s213, 16
        %s215 = scalar_lea.vmem [#allocation2], %s214
        // Predicated region
        $region37: #{tpu_custom_call.1} parent=35 // pred_check
          %p216 = pneg %p43
        $region38: #{tpu_custom_call.1} parent=35 // pred_check_branch
          %218 = sbr.rel (%p216) target = $region40
        $region39: #{tpu_custom_call.1} parent=35 // pred_region
          %220 = dma.done %s212, 256
        $region40: #{tpu_custom_call.1} parent=35 // pred_fallthru
          _
        // Predicated region
        $region41: #{tpu_custom_call.1} parent=35 // pred_check
          %p221 = pneg %p64
        $region42: #{tpu_custom_call.1} parent=35 // pred_check_branch
          %223 = sbr.rel (%p221) target = $region44
        $region43: #{tpu_custom_call.1} parent=35 // pred_region
          %225 = dma.done [#allocation6], 1024
        $region44: #{tpu_custom_call.1} parent=35 // pred_fallthru
          _
        // Predicated region
        $region45: #{tpu_custom_call.1} parent=35 // pred_check
          %p226 = pneg %p85
        $region46: #{tpu_custom_call.1} parent=35 // pred_check_branch
          %228 = sbr.rel (%p226) target = $region48
        $region47: #{tpu_custom_call.1} parent=35 // pred_region
          %230 = dma.done [#allocation6], 1024
        $region48: #{tpu_custom_call.1} parent=35 // pred_fallthru
          _
        %s231 = sand.u32 %s30, 1
        %s232 = scalar_lea.sflag [#allocation3], %s231
        %s233 = sand.u32 %s30, 1
        %s234 = smul.addr %s233, 16
        %s235 = scalar_lea.vmem [#allocation2], %s234
        %p236 = pneg %p43
        %p237 = pneg %p40
        %p238 = pneg %p64
        %p239 = pneg %p61
        %p240 = pneg %p85
        %p241 = pneg %p82
        %p242 = pneg %p106
        %p243 = pneg %p103
        %p244 = pneg %p132
        %p245 = pneg %p129
        %s246 = sand.u32 %s119, 1
        %s247 = scalar_lea.sflag [#allocation4], %s246
        %s248 = sand.u32 %s119, 1
        %s249 = smul.addr %s248, 16
        %s250 = scalar_lea.vmem [#allocation8], %s249
        %s251 = smul.u32 2, %s22
        %v252 = vld [vmem:[%s215] sm:$0xff]
        %v253 = vld [vmem:[%s215 + $0x8] sm:$0xff]
        %v254 = vld [vmem:[#allocation5] sm:$0xff]
        %v255 = vld [vmem:[#allocation5 + $0x8] sm:$0xff]
        %v256 = vld [vmem:[#allocation5 + $0x10] sm:$0xff]
        %v257 = vld [vmem:[#allocation5 + $0x18] sm:$0xff]
        %v258 = vld [vmem:[#allocation5 + $0x20] sm:$0xff]
        %v259 = vld [vmem:[#allocation5 + $0x28] sm:$0xff]
        %v260 = vld [vmem:[#allocation5 + $0x30] sm:$0xff]
        %v261 = vld [vmem:[#allocation5 + $0x38] sm:$0xff]
        %vm262 = vcmask 261120
        %v264 = vsel %vm262, %v252, 0
        %v267 = vsel %vm262, %v253, 0
        %269 = vmatpush.msra.mxu0 0.0
        %270 = vmatpush.msra.mxu0 0.0
        %271 = vmatpush.msra.mxu0 0.0
        %272 = vmatpush.msra.mxu0 0.0
        %273 = vmatpush.msra.mxu0 0.0
        %274 = vmatpush.msra.mxu0 0.0
        %275 = vmatpush.msra.mxu0 0.0
        %276 = vmatpush.msra.mxu0 0.0
        %277 = vmatpush.msra.mxu0 0.0
        %278 = vmatpush.msra.mxu0 0.0
        %279 = vmatpush.msra.mxu0 0.0
        %280 = vmatpush.msra.mxu0 0.0
        %281 = vmatpush.msra.mxu0 %v260
        %282 = vmatpush.msra.mxu0 %v258
        %283 = vmatpush.msra.mxu0 %v256
        %284 = vmatpush.msra.mxu0 %v254
        %285 = vmatmul.f32.gmra.mxu0 %v264
        %v286 = vpop.f32.mrf.mxu0
        %v287 = vadd.f32 0.0, %v286
        %288 = vmatmul.f32.gmra.mxu0 %v267
        %v289 = vpop.f32.mrf.mxu0
        %v290 = vadd.f32 0.0, %v289
        %291 = vdwg.mxu0
        %292 = vmatpush.msra.mxu0 0.0
        %293 = vmatpush.msra.mxu0 0.0
        %294 = vmatpush.msra.mxu0 0.0
        %295 = vmatpush.msra.mxu0 0.0
        %296 = vmatpush.msra.mxu0 0.0
        %297 = vmatpush.msra.mxu0 0.0
        %298 = vmatpush.msra.mxu0 0.0
        %299 = vmatpush.msra.mxu0 0.0
        %300 = vmatpush.msra.mxu0 0.0
        %301 = vmatpush.msra.mxu0 0.0
        %302 = vmatpush.msra.mxu0 0.0
        %303 = vmatpush.msra.mxu0 0.0
        %304 = vmatpush.msra.mxu0 %v261
        %305 = vmatpush.msra.mxu0 %v259
        %306 = vmatpush.msra.mxu0 %v257
        %307 = vmatpush.msra.mxu0 %v255
        %308 = vmatmul.f32.gmra.mxu0 %v264
        %v309 = vpop.f32.mrf.mxu0
        %v310 = vadd.f32 0.0, %v309
        %311 = vmatmul.f32.gmra.mxu0 %v267
        %v312 = vpop.f32.mrf.mxu0
        %v313 = vadd.f32 0.0, %v312
        %314 = vdwg.mxu0
        %317 = vrot.lane.b32.xlu0 %v287, 80
        %v318 = vpop.permute.xlu0 %317
        %319 = vrot.lane.b32.xlu0 %v290, 80
        %v320 = vpop.permute.xlu0 %319
        %323 = vrot.lane.b32.xlu0 %v287, 32
        %v324 = vpop.permute.xlu0 %323
        %325 = vrot.lane.b32.xlu0 %v310, 32
        %v326 = vpop.permute.xlu0 %325
        %327 = vrot.lane.b32.xlu0 %v290, 32
        %v328 = vpop.permute.xlu0 %327
        %329 = vrot.lane.b32.xlu0 %v313, 32
        %v330 = vpop.permute.xlu0 %329
        %v331 = vsel %vm262, %v324, %v326
        %v332 = vsel %vm262, %v328, %v330
        %333 = vrot.lane.b32.xlu0 %v310, 112
        %v334 = vpop.permute.xlu0 %333
        %335 = vrot.lane.b32.xlu0 %v313, 112
        %v336 = vpop.permute.xlu0 %335
        %337 = vrot.lane.b32.xlu0 %v287, 112
        %v338 = vpop.permute.xlu0 %337
        %339 = vrot.lane.b32.xlu0 %v290, 112
        %v340 = vpop.permute.xlu0 %339
        %vm341 = vcmask 130048
        %v342 = vsel %vm341, %v287, 0
        %v344 = vsel %vm341, %v290, 0
        %v346 = vsel %vm341, %v338, 0
        %v348 = vsel %vm341, %v340, 0
        %350 = vmatpush.xpose.msra.mxu0 0.0
        %351 = vmatpush.xpose.msra.mxu0 0.0
        %352 = vmatpush.xpose.msra.mxu0 0.0
        %353 = vmatpush.xpose.msra.mxu0 0.0
        %354 = vmatpush.xpose.msra.mxu0 0.0
        %355 = vmatpush.xpose.msra.mxu0 0.0
        %356 = vmatpush.xpose.msra.mxu0 0.0
        %357 = vmatpush.xpose.msra.mxu0 0.0
        %358 = vmatpush.xpose.msra.mxu0 0.0
        %359 = vmatpush.xpose.msra.mxu0 0.0
        %360 = vmatpush.xpose.msra.mxu0 0.0
        %361 = vmatpush.xpose.msra.mxu0 0.0
        %362 = vmatpush.xpose.msra.mxu0 0.0
        %363 = vmatpush.xpose.msra.mxu0 0.0
        %364 = vmatpush.xpose.msra.mxu0 %v348
        %365 = vmatpush.xpose.msra.mxu0 %v346
        %366 = vmatmul.f32.gmra.mxu0 %v342
        %v367 = vpop.f32.mrf.mxu0
        %v368 = vadd.f32 0.0, %v367
        %369 = vmatmul.f32.gmra.mxu0 %v344
        %v370 = vpop.f32.mrf.mxu0
        %v371 = vadd.f32 0.0, %v370
        %372 = vdwg.mxu0
        %373 = vrot.lane.b32.xlu0 %v318, 112
        %v374 = vpop.permute.xlu0 %373
        %375 = vrot.lane.b32.xlu0 %v320, 112
        %v376 = vpop.permute.xlu0 %375
        %v377 = vsel %vm341, %v318, 0
        %v379 = vsel %vm341, %v320, 0
        %v381 = vsel %vm341, %v374, 0
        %v383 = vsel %vm341, %v376, 0
        %385 = vmatpush.xpose.msra.mxu0 0.0
        %386 = vmatpush.xpose.msra.mxu0 0.0
        %387 = vmatpush.xpose.msra.mxu0 0.0
        %388 = vmatpush.xpose.msra.mxu0 0.0
        %389 = vmatpush.xpose.msra.mxu0 0.0
        %390 = vmatpush.xpose.msra.mxu0 0.0
        %391 = vmatpush.xpose.msra.mxu0 0.0
        %392 = vmatpush.xpose.msra.mxu0 0.0
        %393 = vmatpush.xpose.msra.mxu0 0.0
        %394 = vmatpush.xpose.msra.mxu0 0.0
        %395 = vmatpush.xpose.msra.mxu0 0.0
        %396 = vmatpush.xpose.msra.mxu0 0.0
        %397 = vmatpush.xpose.msra.mxu0 0.0
        %398 = vmatpush.xpose.msra.mxu0 0.0
        %399 = vmatpush.xpose.msra.mxu0 %v383
        %400 = vmatpush.xpose.msra.mxu0 %v381
        %401 = vmatmul.f32.gmra.mxu0 %v377
        %v402 = vpop.f32.mrf.mxu0
        %v403 = vadd.f32 0.0, %v402
        %404 = vmatmul.f32.gmra.mxu0 %v379
        %v405 = vpop.f32.mrf.mxu0
        %v406 = vadd.f32 0.0, %v405
        %407 = vdwg.mxu0
        %408 = vrot.lane.b32.xlu0 %v331, 112
        %v409 = vpop.permute.xlu0 %408
        %410 = vrot.lane.b32.xlu0 %v332, 112
        %v411 = vpop.permute.xlu0 %410
        %v412 = vsel %vm341, %v331, 0
        %v414 = vsel %vm341, %v332, 0
        %v416 = vsel %vm341, %v409, 0
        %v418 = vsel %vm341, %v411, 0
        %420 = vmatpush.xpose.msra.mxu0 0.0
        %421 = vmatpush.xpose.msra.mxu0 0.0
        %422 = vmatpush.xpose.msra.mxu0 0.0
        %423 = vmatpush.xpose.msra.mxu0 0.0
        %424 = vmatpush.xpose.msra.mxu0 0.0
        %425 = vmatpush.xpose.msra.mxu0 0.0
        %426 = vmatpush.xpose.msra.mxu0 0.0
        %427 = vmatpush.xpose.msra.mxu0 0.0
        %428 = vmatpush.xpose.msra.mxu0 0.0
        %429 = vmatpush.xpose.msra.mxu0 0.0
        %430 = vmatpush.xpose.msra.mxu0 0.0
        %431 = vmatpush.xpose.msra.mxu0 0.0
        %432 = vmatpush.xpose.msra.mxu0 0.0
        %433 = vmatpush.xpose.msra.mxu0 0.0
        %434 = vmatpush.xpose.msra.mxu0 %v418
        %435 = vmatpush.xpose.msra.mxu0 %v416
        %436 = vmatmul.f32.gmra.mxu0 %v412
        %v437 = vpop.f32.mrf.mxu0
        %v438 = vadd.f32 0.0, %v437
        %439 = vmatmul.f32.gmra.mxu0 %v414
        %v440 = vpop.f32.mrf.mxu0
        %v441 = vadd.f32 0.0, %v440
        %442 = vdwg.mxu0
        %443 = vrot.lane.b32.xlu0 %v334, 112
        %v444 = vpop.permute.xlu0 %443
        %445 = vrot.lane.b32.xlu0 %v336, 112
        %v446 = vpop.permute.xlu0 %445
        %v447 = vsel %vm341, %v334, 0
        %v449 = vsel %vm341, %v336, 0
        %v451 = vsel %vm341, %v444, 0
        %v453 = vsel %vm341, %v446, 0
        %455 = vmatpush.xpose.msra.mxu0 0.0
        %456 = vmatpush.xpose.msra.mxu0 0.0
        %457 = vmatpush.xpose.msra.mxu0 0.0
        %458 = vmatpush.xpose.msra.mxu0 0.0
        %459 = vmatpush.xpose.msra.mxu0 0.0
        %460 = vmatpush.xpose.msra.mxu0 0.0
        %461 = vmatpush.xpose.msra.mxu0 0.0
        %462 = vmatpush.xpose.msra.mxu0 0.0
        %463 = vmatpush.xpose.msra.mxu0 0.0
        %464 = vmatpush.xpose.msra.mxu0 0.0
        %465 = vmatpush.xpose.msra.mxu0 0.0
        %466 = vmatpush.xpose.msra.mxu0 0.0
        %467 = vmatpush.xpose.msra.mxu0 0.0
        %468 = vmatpush.xpose.msra.mxu0 0.0
        %469 = vmatpush.xpose.msra.mxu0 %v453
        %470 = vmatpush.xpose.msra.mxu0 %v451
        %471 = vmatmul.f32.gmra.mxu0 %v447
        %v472 = vpop.f32.mrf.mxu0
        %v473 = vadd.f32 0.0, %v472
        %474 = vmatmul.f32.gmra.mxu0 %v449
        %v475 = vpop.f32.mrf.mxu0
        %v476 = vadd.f32 0.0, %v475
        %477 = vdwg.mxu0
        %v478 = vsel %vm341, %v368, -inf
        %479 = vmax.xlane.f32.xlu0 %v478
        %v480 = vpop.xlane.xlu0 %479
        %v481 = vsel %vm341, %v371, -inf
        %482 = vmax.xlane.f32.xlu0 %v481
        %v483 = vpop.xlane.xlu0 %482
        %v484 = vsel %vm341, %v403, -inf
        %485 = vmax.xlane.f32.xlu0 %v484
        %v486 = vpop.xlane.xlu0 %485
        %v487 = vsel %vm341, %v406, -inf
        %488 = vmax.xlane.f32.xlu0 %v487
        %v489 = vpop.xlane.xlu0 %488
        %v490 = vsel %vm341, %v438, -inf
        %491 = vmax.xlane.f32.xlu0 %v490
        %v492 = vpop.xlane.xlu0 %491
        %v493 = vsel %vm341, %v441, -inf
        %494 = vmax.xlane.f32.xlu0 %v493
        %v495 = vpop.xlane.xlu0 %494
        %v496 = vsel %vm341, %v473, -inf
        %497 = vmax.xlane.f32.xlu0 %v496
        %v498 = vpop.xlane.xlu0 %497
        %v499 = vsel %vm341, %v476, -inf
        %500 = vmax.xlane.f32.xlu0 %v499
        %v501 = vpop.xlane.xlu0 %500
        %v502 = vsub.f32 %v368, %v480
        %v503 = vsub.f32 %v371, %v483
        %v504 = vsub.f32 %v403, %v486
        %v505 = vsub.f32 %v406, %v489
        %v506 = vsub.f32 %v438, %v492
        %v507 = vsub.f32 %v441, %v495
        %v508 = vsub.f32 %v473, %v498
        %v509 = vsub.f32 %v476, %v501
        %v510 = vmul.f32 %v502, 1.442695
        %v511 = vpow.pop %v510
        %v512 = vmul.f32 %v503, 1.442695
        %v513 = vpow.pop %v512
        %v514 = vmul.f32 %v504, 1.442695
        %v515 = vpow.pop %v514
        %v516 = vmul.f32 %v505, 1.442695
        %v517 = vpow.pop %v516
        %v518 = vmul.f32 %v506, 1.442695
        %v519 = vpow.pop %v518
        %v520 = vmul.f32 %v507, 1.442695
        %v521 = vpow.pop %v520
        %v522 = vmul.f32 %v508, 1.442695
        %v523 = vpow.pop %v522
        %v524 = vmul.f32 %v509, 1.442695
        %v525 = vpow.pop %v524
        %v526 = vsel %vm341, %v511, 0.0
        %527 = vadd.xlane.f32.xlu0 %v526
        %v528 = vpop.xlane.xlu0 %527
        %v529 = vsel %vm341, %v513, 0.0
        %530 = vadd.xlane.f32.xlu0 %v529
        %v531 = vpop.xlane.xlu0 %530
        %v532 = vsel %vm341, %v515, 0.0
        %533 = vadd.xlane.f32.xlu0 %v532
        %v534 = vpop.xlane.xlu0 %533
        %v535 = vsel %vm341, %v517, 0.0
        %536 = vadd.xlane.f32.xlu0 %v535
        %v537 = vpop.xlane.xlu0 %536
        %v538 = vsel %vm341, %v519, 0.0
        %539 = vadd.xlane.f32.xlu0 %v538
        %v540 = vpop.xlane.xlu0 %539
        %v541 = vsel %vm341, %v521, 0.0
        %542 = vadd.xlane.f32.xlu0 %v541
        %v543 = vpop.xlane.xlu0 %542
        %v544 = vsel %vm341, %v523, 0.0
        %545 = vadd.xlane.f32.xlu0 %v544
        %v546 = vpop.xlane.xlu0 %545
        %v547 = vsel %vm341, %v525, 0.0
        %548 = vadd.xlane.f32.xlu0 %v547
        %v549 = vpop.xlane.xlu0 %548
        %v550 = vrcp.pop %v528
        %v551 = vrcp.pop %v531
        %v552 = vrcp.pop %v534
        %v553 = vrcp.pop %v537
        %v554 = vrcp.pop %v540
        %v555 = vrcp.pop %v543
        %v556 = vrcp.pop %v546
        %v557 = vrcp.pop %v549
        %v558 = vmul.f32 %v511, %v550
        %v559 = vmul.f32 %v513, %v551
        %v560 = vmul.f32 %v515, %v552
        %v561 = vmul.f32 %v517, %v553
        %v562 = vmul.f32 %v519, %v554
        %v563 = vmul.f32 %v521, %v555
        %v564 = vmul.f32 %v523, %v556
        %v565 = vmul.f32 %v525, %v557
        %566 = vrot.lane.b32.xlu0 %v287, 96
        %v567 = vpop.permute.xlu0 %566
        %568 = vrot.lane.b32.xlu0 %v290, 96
        %v569 = vpop.permute.xlu0 %568
        %v573 = vsel %vm341, %v558, 0
        %v576 = vsel %vm341, %v559, 0
        %578 = vmatpush.msra.mxu0 0.0
        %579 = vmatpush.msra.mxu0 0.0
        %580 = vmatpush.msra.mxu0 0.0
        %581 = vmatpush.msra.mxu0 0.0
        %582 = vmatpush.msra.mxu0 0.0
        %583 = vmatpush.msra.mxu0 0.0
        %584 = vmatpush.msra.mxu0 0.0
        %585 = vmatpush.msra.mxu0 0.0
        %586 = vmatpush.msra.mxu0 0.0
        %587 = vmatpush.msra.mxu0 0.0
        %588 = vmatpush.msra.mxu0 0.0
        %589 = vmatpush.msra.mxu0 0.0
        %590 = vmatpush.msra.mxu0 0.0
        %591 = vmatpush.msra.mxu0 0.0
        %592 = vmatpush.msra.mxu0 %v569
        %593 = vmatpush.msra.mxu0 %v567
        %594 = vmatmul.f32.gmra.mxu0 %v573
        %v595 = vpop.f32.mrf.mxu0
        %v596 = vadd.f32 0.0, %v595
        %597 = vmatmul.f32.gmra.mxu0 %v576
        %v598 = vpop.f32.mrf.mxu0
        %v599 = vadd.f32 0.0, %v598
        %600 = vdwg.mxu0
        %601 = vrot.lane.b32.xlu0 %v318, 96
        %v602 = vpop.permute.xlu0 %601
        %603 = vrot.lane.b32.xlu0 %v320, 96
        %v604 = vpop.permute.xlu0 %603
        %v608 = vsel %vm341, %v560, 0
        %v611 = vsel %vm341, %v561, 0
        %613 = vmatpush.msra.mxu0 0.0
        %614 = vmatpush.msra.mxu0 0.0
        %615 = vmatpush.msra.mxu0 0.0
        %616 = vmatpush.msra.mxu0 0.0
        %617 = vmatpush.msra.mxu0 0.0
        %618 = vmatpush.msra.mxu0 0.0
        %619 = vmatpush.msra.mxu0 0.0
        %620 = vmatpush.msra.mxu0 0.0
        %621 = vmatpush.msra.mxu0 0.0
        %622 = vmatpush.msra.mxu0 0.0
        %623 = vmatpush.msra.mxu0 0.0
        %624 = vmatpush.msra.mxu0 0.0
        %625 = vmatpush.msra.mxu0 0.0
        %626 = vmatpush.msra.mxu0 0.0
        %627 = vmatpush.msra.mxu0 %v604
        %628 = vmatpush.msra.mxu0 %v602
        %629 = vmatmul.f32.gmra.mxu0 %v608
        %v630 = vpop.f32.mrf.mxu0
        %v631 = vadd.f32 0.0, %v630
        %632 = vmatmul.f32.gmra.mxu0 %v611
        %v633 = vpop.f32.mrf.mxu0
        %v634 = vadd.f32 0.0, %v633
        %635 = vdwg.mxu0
        %636 = vrot.lane.b32.xlu0 %v331, 96
        %v637 = vpop.permute.xlu0 %636
        %638 = vrot.lane.b32.xlu0 %v332, 96
        %v639 = vpop.permute.xlu0 %638
        %v643 = vsel %vm341, %v562, 0
        %v646 = vsel %vm341, %v563, 0
        %648 = vmatpush.msra.mxu0 0.0
        %649 = vmatpush.msra.mxu0 0.0
        %650 = vmatpush.msra.mxu0 0.0
        %651 = vmatpush.msra.mxu0 0.0
        %652 = vmatpush.msra.mxu0 0.0
        %653 = vmatpush.msra.mxu0 0.0
        %654 = vmatpush.msra.mxu0 0.0
        %655 = vmatpush.msra.mxu0 0.0
        %656 = vmatpush.msra.mxu0 0.0
        %657 = vmatpush.msra.mxu0 0.0
        %658 = vmatpush.msra.mxu0 0.0
        %659 = vmatpush.msra.mxu0 0.0
        %660 = vmatpush.msra.mxu0 0.0
        %661 = vmatpush.msra.mxu0 0.0
        %662 = vmatpush.msra.mxu0 %v639
        %663 = vmatpush.msra.mxu0 %v637
        %664 = vmatmul.f32.gmra.mxu0 %v643
        %v665 = vpop.f32.mrf.mxu0
        %v666 = vadd.f32 0.0, %v665
        %667 = vmatmul.f32.gmra.mxu0 %v646
        %v668 = vpop.f32.mrf.mxu0
        %v669 = vadd.f32 0.0, %v668
        %670 = vdwg.mxu0
        %671 = vrot.lane.b32.xlu0 %v334, 96
        %v672 = vpop.permute.xlu0 %671
        %673 = vrot.lane.b32.xlu0 %v336, 96
        %v674 = vpop.permute.xlu0 %673
        %v678 = vsel %vm341, %v564, 0
        %v681 = vsel %vm341, %v565, 0
        %683 = vmatpush.msra.mxu0 0.0
        %684 = vmatpush.msra.mxu0 0.0
        %685 = vmatpush.msra.mxu0 0.0
        %686 = vmatpush.msra.mxu0 0.0
        %687 = vmatpush.msra.mxu0 0.0
        %688 = vmatpush.msra.mxu0 0.0
        %689 = vmatpush.msra.mxu0 0.0
        %690 = vmatpush.msra.mxu0 0.0
        %691 = vmatpush.msra.mxu0 0.0
        %692 = vmatpush.msra.mxu0 0.0
        %693 = vmatpush.msra.mxu0 0.0
        %694 = vmatpush.msra.mxu0 0.0
        %695 = vmatpush.msra.mxu0 0.0
        %696 = vmatpush.msra.mxu0 0.0
        %697 = vmatpush.msra.mxu0 %v674
        %698 = vmatpush.msra.mxu0 %v672
        %699 = vmatmul.f32.gmra.mxu0 %v678
        %v700 = vpop.f32.mrf.mxu0
        %v701 = vadd.f32 0.0, %v700
        %702 = vmatmul.f32.gmra.mxu0 %v681
        %v703 = vpop.f32.mrf.mxu0
        %v704 = vadd.f32 0.0, %v703
        %705 = vdwg.mxu0
        %v706 = vld [vmem:[#allocation7] sm:$0xff]
        %v707 = vld [vmem:[#allocation7 + $0x8] sm:$0xff]
        %v708 = vld [vmem:[#allocation7 + $0x10] sm:$0xff]
        %v709 = vld [vmem:[#allocation7 + $0x18] sm:$0xff]
        %v710 = vld [vmem:[#allocation7 + $0x20] sm:$0xff]
        %v711 = vld [vmem:[#allocation7 + $0x28] sm:$0xff]
        %v712 = vld [vmem:[#allocation7 + $0x30] sm:$0xff]
        %v713 = vld [vmem:[#allocation7 + $0x38] sm:$0xff]
        %v715 = vsel %vm341, %v596, 0
        %v718 = vsel %vm341, %v599, 0
        %720 = vmatpush.msra.mxu0 0.0
        %721 = vmatpush.msra.mxu0 0.0
        %722 = vmatpush.msra.mxu0 0.0
        %723 = vmatpush.msra.mxu0 0.0
        %724 = vmatpush.msra.mxu0 0.0
        %725 = vmatpush.msra.mxu0 0.0
        %726 = vmatpush.msra.mxu0 0.0
        %727 = vmatpush.msra.mxu0 0.0
        %728 = vmatpush.msra.mxu0 0.0
        %729 = vmatpush.msra.mxu0 0.0
        %730 = vmatpush.msra.mxu0 0.0
        %731 = vmatpush.msra.mxu0 0.0
        %732 = vmatpush.msra.mxu0 0.0
        %733 = vmatpush.msra.mxu0 0.0
        %734 = vmatpush.msra.mxu0 %v707
        %735 = vmatpush.msra.mxu0 %v706
        %736 = vmatmul.f32.gmra.mxu0 %v715
        %v737 = vpop.f32.mrf.mxu0
        %v738 = vadd.f32 0.0, %v737
        %739 = vmatmul.f32.gmra.mxu0 %v718
        %v740 = vpop.f32.mrf.mxu0
        %v741 = vadd.f32 0.0, %v740
        %742 = vdwg.mxu0
        %v744 = vsel %vm341, %v631, 0
        %v747 = vsel %vm341, %v634, 0
        %749 = vmatpush.msra.mxu0 0.0
        %750 = vmatpush.msra.mxu0 0.0
        %751 = vmatpush.msra.mxu0 0.0
        %752 = vmatpush.msra.mxu0 0.0
        %753 = vmatpush.msra.mxu0 0.0
        %754 = vmatpush.msra.mxu0 0.0
        %755 = vmatpush.msra.mxu0 0.0
        %756 = vmatpush.msra.mxu0 0.0
        %757 = vmatpush.msra.mxu0 0.0
        %758 = vmatpush.msra.mxu0 0.0
        %759 = vmatpush.msra.mxu0 0.0
        %760 = vmatpush.msra.mxu0 0.0
        %761 = vmatpush.msra.mxu0 0.0
        %762 = vmatpush.msra.mxu0 0.0
        %763 = vmatpush.msra.mxu0 %v709
        %764 = vmatpush.msra.mxu0 %v708
        %765 = vmatmul.f32.gmra.mxu0 %v744
        %v766 = vpop.f32.mrf.mxu0
        %v767 = vadd.f32 0.0, %v766
        %768 = vmatmul.f32.gmra.mxu0 %v747
        %v769 = vpop.f32.mrf.mxu0
        %v770 = vadd.f32 0.0, %v769
        %771 = vdwg.mxu0
        %v773 = vsel %vm341, %v666, 0
        %v776 = vsel %vm341, %v669, 0
        %778 = vmatpush.msra.mxu0 0.0
        %779 = vmatpush.msra.mxu0 0.0
        %780 = vmatpush.msra.mxu0 0.0
        %781 = vmatpush.msra.mxu0 0.0
        %782 = vmatpush.msra.mxu0 0.0
        %783 = vmatpush.msra.mxu0 0.0
        %784 = vmatpush.msra.mxu0 0.0
        %785 = vmatpush.msra.mxu0 0.0
        %786 = vmatpush.msra.mxu0 0.0
        %787 = vmatpush.msra.mxu0 0.0
        %788 = vmatpush.msra.mxu0 0.0
        %789 = vmatpush.msra.mxu0 0.0
        %790 = vmatpush.msra.mxu0 0.0
        %791 = vmatpush.msra.mxu0 0.0
        %792 = vmatpush.msra.mxu0 %v711
        %793 = vmatpush.msra.mxu0 %v710
        %794 = vmatmul.f32.gmra.mxu0 %v773
        %v795 = vpop.f32.mrf.mxu0
        %v796 = vadd.f32 0.0, %v795
        %797 = vmatmul.f32.gmra.mxu0 %v776
        %v798 = vpop.f32.mrf.mxu0
        %v799 = vadd.f32 0.0, %v798
        %800 = vdwg.mxu0
        %v802 = vsel %vm341, %v701, 0
        %v805 = vsel %vm341, %v704, 0
        %807 = vmatpush.msra.mxu0 0.0
        %808 = vmatpush.msra.mxu0 0.0
        %809 = vmatpush.msra.mxu0 0.0
        %810 = vmatpush.msra.mxu0 0.0
        %811 = vmatpush.msra.mxu0 0.0
        %812 = vmatpush.msra.mxu0 0.0
        %813 = vmatpush.msra.mxu0 0.0
        %814 = vmatpush.msra.mxu0 0.0
        %815 = vmatpush.msra.mxu0 0.0
        %816 = vmatpush.msra.mxu0 0.0
        %817 = vmatpush.msra.mxu0 0.0
        %818 = vmatpush.msra.mxu0 0.0
        %819 = vmatpush.msra.mxu0 0.0
        %820 = vmatpush.msra.mxu0 0.0
        %821 = vmatpush.msra.mxu0 %v713
        %822 = vmatpush.msra.mxu0 %v712
        %823 = vmatmul.f32.gmra.mxu0 %v802
        %v824 = vpop.f32.mrf.mxu0
        %v825 = vadd.f32 0.0, %v824
        %826 = vmatmul.f32.gmra.mxu0 %v805
        %v827 = vpop.f32.mrf.mxu0
        %v828 = vadd.f32 0.0, %v827
        %829 = vdwg.mxu0
        %v830 = vadd.f32 %v738, %v767
        %v831 = vadd.f32 %v830, %v796
        %v832 = vadd.f32 %v831, %v825
        %v833 = vadd.f32 %v741, %v770
        %v834 = vadd.f32 %v833, %v799
        %v835 = vadd.f32 %v834, %v828
        %v836 = vld [vmem:[%s3] sm:$0x1]
        %v838 = vperm.slane %v836, 0
        %v840 = vadd.f32 %v832, %v838
        %v841 = vadd.f32 %v835, %v838
        %842 = vst [vmem:[%s250] sm:$0xff] %v840
        %843 = vst [vmem:[%s250 + $0x8] sm:$0xff] %v841
        %s844 = sand.u32 %s119, 1
        %s845 = scalar_lea.sflag [#allocation4], %s844
        %s846 = sand.u32 %s119, 1
        %s847 = smul.addr %s846, 16
        %s848 = scalar_lea.vmem [#allocation8], %s847
        // Predicated region
        $region49: #{tpu_custom_call.1} parent=35 // pred_check
          %p849 = pneg %p129
        $region50: #{tpu_custom_call.1} parent=35 // pred_check_branch
          %851 = sbr.rel (%p849) target = $region52
        $region51: #{tpu_custom_call.1} parent=35 // pred_region
          %853 = vsyncadd %s845, 0
          %s854 = smul.addr %s22, 2
          %s855 = smul.addr %s854, 8
          %s856 = scalar_lea.hbm %s4, %s855
          %s857 = sshll.u32 %s848, 4
          %s858 = int_to_ptr.vmem [resolvable:$true] %s857
          %s859 = sshll.u32 %s856, 4
          %s860 = int_to_ptr.hbm [resolvable:$true] %s859
          %865 = dma.vmem_to_hbm [thread:$0]  %s858, 256, %s860, %s845, 128, 128, 8
        $region52: #{tpu_custom_call.1} parent=35 // pred_fallthru
          _
      $region36: #{tpu_custom_call.1} parent=5 // pred_fallthru
        _
      %p866 = scmp.le.s32.totalorder 2, %s17
      // Predicated region
      $region53: #{tpu_custom_call.1} parent=5 // pred_check
        %p867 = pneg %p866
      $region54: #{tpu_custom_call.1} parent=5 // pred_check_branch
        %869 = sbr.rel (%p867) target = $region56
      $region55: #{tpu_custom_call.1} parent=5 // pred_region
        %s870 = ssub.s32 %s17, 2
        // Predicated region
        $region57: #{tpu_custom_call.1} parent=55 // pred_check
          %p871 = pneg %p135
        $region58: #{tpu_custom_call.1} parent=55 // pred_check_branch
          %873 = sbr.rel (%p871) target = $region60
        $region59: #{tpu_custom_call.1} parent=55 // pred_region
          %s874 = sand.u32 %s120, 1
          %s875 = scalar_lea.sflag [#allocation4], %s874
          %s876 = sand.u32 %s120, 1
          %s877 = smul.addr %s876, 16
          %s878 = scalar_lea.vmem [#allocation8], %s877
          %880 = dma.done %s875, 256
        $region60: #{tpu_custom_call.1} parent=55 // pred_fallthru
          _
      $region56: #{tpu_custom_call.1} parent=5 // pred_fallthru
        _
    $region6: #{tpu_custom_call.1} parent=1 // loop_footer
      %s21 = sadd.s32 1, %s17
    $region7: #{tpu_custom_call.1} parent=1 // loop_footer_branch
      %16 = sbr.rel target = $region3
    $region8: #{tpu_custom_call.1} parent=1 // loop_exit
      _
    %881 = vsyncpa [#allocation3], 1
    %s882 = scalar_lea.sflag [#allocation3], 1
    %883 = vsyncpa %s882, 1
    %884 = vsyncpa [#allocation6], 1
    %885 = vsyncpa [#allocation4], 1
    %s886 = scalar_lea.sflag [#allocation4], 1
    %887 = vsyncpa %s886, 1

// kernel: tpu_custom_call.1
$region0: #{tpu_custom_call.1}
  #allocation0 [shape = 'u32[]', space=smem, size = 0x4, offset = 0x4, fixed_abs, tag = 'smem constant byte address 0x4 - core index']
  #allocation1 [shape = 'u32[72,128]{1,0:T(1,128)}', space=vmem, size = 0x9000, scoped, tag = 'internal scratch']
  %s0 = inlined_call_operand.hbm [shape: f32[32,32], index: 0, kind: input, shape index: {}]
  %s1 = inlined_call_operand.hbm [shape: f32[32,192], index: 1, kind: input, shape index: {}]
  %s2 = inlined_call_operand.hbm [shape: f32[4,16,128], index: 2, kind: input, shape index: {}]
  %s3 = inlined_call_operand.vmem [shape: f32[1,128], index: 3, kind: input, shape index: {}]
  %s4 = inlined_call_operand.hbm [shape: f32[2,16,128], index: 4, kind: output, shape index: {}]
  %s5 = sld [smem:[#allocation0]]
  $region61: #{tpu_custom_call.1} parent=0
    _
  %s7 = ssub.s32 1, %s5
  %s8 = scalar_select 0, %s7, %s5
  $region1: #{tpu_custom_call.1} parent=0
    #allocation2 [shape = 'u8[16384]{0}', space=vmem, size = 0x4000, scoped, tag = 'input window, operand 0']
    #allocation3 [shape = 's32[2]{0}', space=sflag, size = 0x8, scoped, tag = 'scoped memory for tpu_custom_call.1']
    #allocation4 [shape = 's32[2]{0}', space=sflag, size = 0x8, scoped, tag = 'scoped memory for tpu_custom_call.1']
    #allocation5 [shape = 'u8[32768]{0}', space=vmem, size = 0x8000, scoped, tag = 'input window, operand 1, single buffered']
    #allocation6 [shape = 's32[1]{0}', space=sflag, size = 0x4, scoped, tag = 'scoped memory for tpu_custom_call.1']
    #allocation7 [shape = 'u8[32768]{0}', space=vmem, size = 0x8000, scoped, tag = 'input window, operand 2, single buffered']
    #allocation8 [shape = 'u8[16384]{0}', space=vmem, size = 0x4000, scoped, tag = 'output window, operand 0']
    %9 = vsyncpa [#allocation3], 0
    %s10 = scalar_lea.sflag [#allocation3], 1
    %11 = vsyncpa %s10, 0
    %12 = vsyncpa [#allocation6], 0
    %13 = vsyncpa [#allocation4], 0
    %s14 = scalar_lea.sflag [#allocation4], 1
    %15 = vsyncpa %s14, 0
    loop: start=0, step=1, limit=4
    $region2: #{tpu_custom_call.1} parent=1 // loop_pre_header
      _
    $region3: #{tpu_custom_call.1} parent=1 // loop_header
      %s17 = sphi 0, %s21
      %p18 = scmp.ge.s32.totalorder %s17, 4
      %s27 = sphi 0, %s29
      %s30 = sphi 0, %s27
      %s31 = sphi 0, %s30
      %s47 = sphi 0, %s31
      %s51 = sphi 0, %s51
      %s53 = sphi 0, %s51
      %s54 = sphi 0, %s53
      %s68 = sphi 0, %s54
      %s72 = sphi 0, %s72
      %s74 = sphi 0, %s72
      %s75 = sphi 0, %s74
      %s89 = sphi 0, %s75
      %s93 = sphi 0, %s93
      %s95 = sphi 0, %s93
      %s96 = sphi 0, %s95
      %s110 = sphi 0, %s96
      %s116 = sphi 0, %s118
      %s119 = sphi 0, %s116
      %s120 = sphi 0, %s119
      %s136 = sphi 0, %s120
    $region4: #{tpu_custom_call.1} parent=1 // loop_header_branch
      %20 = sbr.rel (%p18) target = $region8
    $region5: #{tpu_custom_call.1} parent=1 // loop_body
      %s22 = ssub.s32 %s17, 1
      %s23 = ssub.s32 %s17, 2
      %s24 = sadd.s32 %s17, 1
      %s25 = ssub.s32 %s17, %s24
      %p26 = scmp.eq.s32.totalorder %s25, 0
      %s28 = sadd.s32 %s27, 1
      %s29 = scalar_select %p26, %s27, %s28
      %p32 = pneg %p26
      %p33 = scmp.eq.s32.totalorder %s17, 1
      %p34 = por %p32, %p33
      %p35 = scmp.ne.s32.totalorder %s27, %s30
      %p36 = scmp.eq.s32.totalorder %s17, 0
      %p37 = por %p35, %p36
      %p38 = scmp.ne.s32.totalorder %s27, %s30
      %p39 = scmp.eq.s32.totalorder %s22, 1
      %p40 = por %p38, %p39
      %p41 = scmp.ne.s32.totalorder %s30, %s31
      %p42 = scmp.eq.s32.totalorder %s22, 0
      %p43 = por %p41, %p42
      %p44 = scmp.ne.s32.totalorder %s30, %s31
      %p45 = scmp.eq.s32.totalorder %s23, 1
      %p46 = por %p44, %p45
      %p48 = scmp.ne.s32.totalorder %s31, %s47
      %p49 = scmp.eq.s32.totalorder %s23, 0
      %p50 = por %p48, %p49
      %s52 = sadd.s32 %s51, 1
      %p55 = scmp.eq.s32.totalorder %s17, 1
      %p56 = scmp.ne.s32.totalorder %s51, %s53
      %p57 = scmp.eq.s32.totalorder %s17, 0
      %p58 = por %p56, %p57
      %p59 = scmp.ne.s32.totalorder %s51, %s53
      %p60 = scmp.eq.s32.totalorder %s22, 1
      %p61 = por %p59, %p60
      %p62 = scmp.ne.s32.totalorder %s53, %s54
      %p63 = scmp.eq.s32.totalorder %s22, 0
      %p64 = por %p62, %p63
      %p65 = scmp.ne.s32.totalorder %s53, %s54
      %p66 = scmp.eq.s32.totalorder %s23, 1
      %p67 = por %p65, %p66
      %p69 = scmp.ne.s32.totalorder %s54, %s68
      %p70 = scmp.eq.s32.totalorder %s23, 0
      %p71 = por %p69, %p70
      %s73 = sadd.s32 %s72, 1
      %p76 = scmp.eq.s32.totalorder %s17, 1
      %p77 = scmp.ne.s32.totalorder %s72, %s74
      %p78 = scmp.eq.s32.totalorder %s17, 0
      %p79 = por %p77, %p78
      %p80 = scmp.ne.s32.totalorder %s72, %s74
      %p81 = scmp.eq.s32.totalorder %s22, 1
      %p82 = por %p80, %p81
      %p83 = scmp.ne.s32.totalorder %s74, %s75
      %p84 = scmp.eq.s32.totalorder %s22, 0
      %p85 = por %p83, %p84
      %p86 = scmp.ne.s32.totalorder %s74, %s75
      %p87 = scmp.eq.s32.totalorder %s23, 1
      %p88 = por %p86, %p87
      %p90 = scmp.ne.s32.totalorder %s75, %s89
      %p91 = scmp.eq.s32.totalorder %s23, 0
      %p92 = por %p90, %p91
      %s94 = sadd.s32 %s93, 1
      %p97 = scmp.eq.s32.totalorder %s17, 1
      %p98 = scmp.ne.s32.totalorder %s93, %s95
      %p99 = scmp.eq.s32.totalorder %s17, 0
      %p100 = por %p98, %p99
      %p101 = scmp.ne.s32.totalorder %s93, %s95
      %p102 = scmp.eq.s32.totalorder %s22, 1
      %p103 = por %p101, %p102
      %p104 = scmp.ne.s32.totalorder %s95, %s96
      %p105 = scmp.eq.s32.totalorder %s22, 0
      %p106 = por %p104, %p105
      %p107 = scmp.ne.s32.totalorder %s95, %s96
      %p108 = scmp.eq.s32.totalorder %s23, 1
      %p109 = por %p107, %p108
      %p111 = scmp.ne.s32.totalorder %s96, %s110
      %p112 = scmp.eq.s32.totalorder %s23, 0
      %p113 = por %p111, %p112
      %s114 = ssub.s32 %s17, %s24
      %p115 = scmp.eq.s32.totalorder %s114, 0
      %s117 = sadd.s32 %s116, 1
      %s118 = scalar_select %p115, %s116, %s117
      %p121 = pneg %p115
      %p122 = scmp.eq.s32.totalorder %s17, 1
      %p123 = por %p121, %p122
      %p124 = scmp.ne.s32.totalorder %s116, %s119
      %p125 = scmp.eq.s32.totalorder %s17, 0
      %p126 = por %p124, %p125
      %p127 = scmp.ne.s32.totalorder %s116, %s119
      %p128 = scmp.eq.s32.totalorder %s22, 1
      %p129 = por %p127, %p128
      %p130 = scmp.ne.s32.totalorder %s119, %s120
      %p131 = scmp.eq.s32.totalorder %s22, 0
      %p132 = por %p130, %p131
      %p133 = scmp.ne.s32.totalorder %s119, %s120
      %p134 = scmp.eq.s32.totalorder %s23, 1
      %p135 = por %p133, %p134
      %p137 = scmp.ne.s32.totalorder %s120, %s136
      %p138 = scmp.eq.s32.totalorder %s23, 0
      %p139 = por %p137, %p138
      %p140 = scmp.le.s32.totalorder 1, %s17
      %p141 = scmp.lt.s32.totalorder %s17, 3
      %p142 = pnand %p140, %p141
      %p143 = pneg %p142
      // Predicated region
      $region9: #{tpu_custom_call.1} parent=5 // pred_check
        _
      $region10: #{tpu_custom_call.1} parent=5 // pred_check_branch
        %145 = sbr.rel (%p142) target = $region12
      $region11: #{tpu_custom_call.1} parent=5 // pred_region
        %s146 = ssub.s32 %s17, 1
        // Predicated region
        $region13: #{tpu_custom_call.1} parent=11 // pred_check
          %p147 = pneg %p64
        $region14: #{tpu_custom_call.1} parent=11 // pred_check_branch
          %149 = sbr.rel (%p147) target = $region16
        $region15: #{tpu_custom_call.1} parent=11 // pred_region
          %151 = vsyncadd [#allocation6], 0
          %s152 = sshll.u32 %s1, 4
          %s153 = int_to_ptr.hbm [resolvable:$true] %s152
          %s154 = sshll.u32 [#allocation5], 4
          %s155 = int_to_ptr.vmem [resolvable:$true] %s154
          %160 = dma.hbm_to_vmem [thread:$0]  %s153, 1024, %s155, [#allocation6], 256, 256, 16
        $region16: #{tpu_custom_call.1} parent=11 // pred_fallthru
          _
        // Predicated region
        $region17: #{tpu_custom_call.1} parent=11 // pred_check
          %p161 = pneg %p85
        $region18: #{tpu_custom_call.1} parent=11 // pred_check_branch
          %163 = sbr.rel (%p161) target = $region20
        $region19: #{tpu_custom_call.1} parent=11 // pred_region
          %165 = vsyncadd [#allocation6], 0
          %s166 = sshll.u32 %s2, 4
          %s167 = int_to_ptr.hbm [resolvable:$true] %s166
          %s168 = sshll.u32 [#allocation7], 4
          %s169 = int_to_ptr.vmem [resolvable:$true] %s168
          %174 = dma.hbm_to_vmem [thread:$0]  %s167, 1024, %s169, [#allocation6], 128, 128, 8
        $region20: #{tpu_custom_call.1} parent=11 // pred_fallthru
          _
        // Predicated region
        $region21: #{tpu_custom_call.1} parent=11 // pred_check
          %p175 = pneg %p106
        $region22: #{tpu_custom_call.1} parent=11 // pred_check_branch
          %177 = sbr.rel (%p175) target = $region24
        $region23: #{tpu_custom_call.1} parent=11 // pred_region
          _
        $region24: #{tpu_custom_call.1} parent=11 // pred_fallthru
          _
      $region12: #{tpu_custom_call.1} parent=5 // pred_fallthru
        _
      %p178 = scmp.lt.s32.totalorder %s17, 2
      // Predicated region
      $region25: #{tpu_custom_call.1} parent=5 // pred_check
        %p179 = pneg %p178
      $region26: #{tpu_custom_call.1} parent=5 // pred_check_branch
        %181 = sbr.rel (%p179) target = $region28
      $region27: #{tpu_custom_call.1} parent=5 // pred_region
        // Predicated region
        $region29: #{tpu_custom_call.1} parent=27 // pred_check
          %p182 = pneg %p37
        $region30: #{tpu_custom_call.1} parent=27 // pred_check_branch
          %184 = sbr.rel (%p182) target = $region32
        $region31: #{tpu_custom_call.1} parent=27 // pred_region
          %s185 = sand.u32 %s27, 1
          %s186 = scalar_lea.sflag [#allocation3], %s185
          %s187 = sand.u32 %s27, 1
          %s188 = smul.addr %s187, 16
          %s189 = scalar_lea.vmem [#allocation2], %s188
          %s190 = smul.u32 2, %s17
          %192 = vsyncadd %s186, 0
          %s193 = smul.addr %s190, 8
          %s194 = scalar_lea.hbm %s0, %s193
          %s195 = sshll.u32 %s194, 4
          %s196 = int_to_ptr.hbm [resolvable:$true] %s195
          %s197 = sshll.u32 %s189, 4
          %s198 = int_to_ptr.vmem [resolvable:$true] %s197
          %203 = dma.hbm_to_vmem [thread:$0]  %s196, 256, %s198, %s186, 128, 128, 8
        $region32: #{tpu_custom_call.1} parent=27 // pred_fallthru
          _
      $region28: #{tpu_custom_call.1} parent=5 // pred_fallthru
        _
      %p204 = scmp.le.s32.totalorder 1, %s17
      %p205 = scmp.lt.s32.totalorder %s17, 3
      %p206 = pnand %p204, %p205
      %p207 = pneg %p206
      // Predicated region
      $region33: #{tpu_custom_call.1} parent=5 // pred_check
        _
      $region34: #{tpu_custom_call.1} parent=5 // pred_check_branch
        %209 = sbr.rel (%p206) target = $region36
      $region35: #{tpu_custom_call.1} parent=5 // pred_region
        %s210 = ssub.s32 %s17, 1
        %s211 = sand.u32 %s30, 1
        %s212 = scalar_lea.sflag [#allocation3], %s211
        %s213 = sand.u32 %s30, 1
        %s214 = smul.addr %s213, 16
        %s215 = scalar_lea.vmem [#allocation2], %s214
        // Predicated region
        $region37: #{tpu_custom_call.1} parent=35 // pred_check
          %p216 = pneg %p43
        $region38: #{tpu_custom_call.1} parent=35 // pred_check_branch
          %218 = sbr.rel (%p216) target = $region40
        $region39: #{tpu_custom_call.1} parent=35 // pred_region
          %220 = dma.done %s212, 256
        $region40: #{tpu_custom_call.1} parent=35 // pred_fallthru
          _
        // Predicated region
        $region41: #{tpu_custom_call.1} parent=35 // pred_check
          %p221 = pneg %p64
        $region42: #{tpu_custom_call.1} parent=35 // pred_check_branch
          %223 = sbr.rel (%p221) target = $region44
        $region43: #{tpu_custom_call.1} parent=35 // pred_region
          %225 = dma.done [#allocation6], 1024
        $region44: #{tpu_custom_call.1} parent=35 // pred_fallthru
          _
        // Predicated region
        $region45: #{tpu_custom_call.1} parent=35 // pred_check
          %p226 = pneg %p85
        $region46: #{tpu_custom_call.1} parent=35 // pred_check_branch
          %228 = sbr.rel (%p226) target = $region48
        $region47: #{tpu_custom_call.1} parent=35 // pred_region
          %230 = dma.done [#allocation6], 1024
        $region48: #{tpu_custom_call.1} parent=35 // pred_fallthru
          _
        %s231 = sand.u32 %s30, 1
        %s232 = scalar_lea.sflag [#allocation3], %s231
        %s233 = sand.u32 %s30, 1
        %s234 = smul.addr %s233, 16
        %s235 = scalar_lea.vmem [#allocation2], %s234
        %p236 = pneg %p43
        %p237 = pneg %p40
        %p238 = pneg %p64
        %p239 = pneg %p61
        %p240 = pneg %p85
        %p241 = pneg %p82
        %p242 = pneg %p106
        %p243 = pneg %p103
        %p244 = pneg %p132
        %p245 = pneg %p129
        %s246 = sand.u32 %s119, 1
        %s247 = scalar_lea.sflag [#allocation4], %s246
        %s248 = sand.u32 %s119, 1
        %s249 = smul.addr %s248, 16
        %s250 = scalar_lea.vmem [#allocation8], %s249
        %s251 = smul.u32 2, %s22
        %v252 = vld [vmem:[%s215] sm:$0xff]
        %v253 = vld [vmem:[%s215 + $0x8] sm:$0xff]
        %v254 = vld [vmem:[#allocation5] sm:$0xff]
        %v255 = vld [vmem:[#allocation5 + $0x8] sm:$0xff]
        %v256 = vld [vmem:[#allocation5 + $0x10] sm:$0xff]
        %v257 = vld [vmem:[#allocation5 + $0x18] sm:$0xff]
        %v258 = vld [vmem:[#allocation5 + $0x20] sm:$0xff]
        %v259 = vld [vmem:[#allocation5 + $0x28] sm:$0xff]
        %v260 = vld [vmem:[#allocation5 + $0x30] sm:$0xff]
        %v261 = vld [vmem:[#allocation5 + $0x38] sm:$0xff]
        %vm262 = vcmask 261120
        %v264 = vsel %vm262, %v252, 0
        %v267 = vsel %vm262, %v253, 0
        %269 = vmatpush.msra.mxu0 0.0
        %270 = vmatpush.msra.mxu0 0.0
        %271 = vmatpush.msra.mxu0 0.0
        %272 = vmatpush.msra.mxu0 0.0
        %273 = vmatpush.msra.mxu0 0.0
        %274 = vmatpush.msra.mxu0 0.0
        %275 = vmatpush.msra.mxu0 0.0
        %276 = vmatpush.msra.mxu0 0.0
        %277 = vmatpush.msra.mxu0 0.0
        %278 = vmatpush.msra.mxu0 0.0
        %279 = vmatpush.msra.mxu0 0.0
        %280 = vmatpush.msra.mxu0 0.0
        %281 = vmatpush.msra.mxu0 %v260
        %282 = vmatpush.msra.mxu0 %v258
        %283 = vmatpush.msra.mxu0 %v256
        %284 = vmatpush.msra.mxu0 %v254
        %285 = vmatmul.f32.gmra.mxu0 %v264
        %v286 = vpop.f32.mrf.mxu0
        %v287 = vadd.f32 0.0, %v286
        %288 = vmatmul.f32.gmra.mxu0 %v267
        %v289 = vpop.f32.mrf.mxu0
        %v290 = vadd.f32 0.0, %v289
        %291 = vdwg.mxu0
        %292 = vmatpush.msra.mxu0 0.0
        %293 = vmatpush.msra.mxu0 0.0
        %294 = vmatpush.msra.mxu0 0.0
        %295 = vmatpush.msra.mxu0 0.0
        %296 = vmatpush.msra.mxu0 0.0
        %297 = vmatpush.msra.mxu0 0.0
        %298 = vmatpush.msra.mxu0 0.0
        %299 = vmatpush.msra.mxu0 0.0
        %300 = vmatpush.msra.mxu0 0.0
        %301 = vmatpush.msra.mxu0 0.0
        %302 = vmatpush.msra.mxu0 0.0
        %303 = vmatpush.msra.mxu0 0.0
        %304 = vmatpush.msra.mxu0 %v261
        %305 = vmatpush.msra.mxu0 %v259
        %306 = vmatpush.msra.mxu0 %v257
        %307 = vmatpush.msra.mxu0 %v255
        %308 = vmatmul.f32.gmra.mxu0 %v264
        %v309 = vpop.f32.mrf.mxu0
        %v310 = vadd.f32 0.0, %v309
        %311 = vmatmul.f32.gmra.mxu0 %v267
        %v312 = vpop.f32.mrf.mxu0
        %v313 = vadd.f32 0.0, %v312
        %314 = vdwg.mxu0
        %317 = vrot.lane.b32.xlu0 %v287, 80
        %v318 = vpop.permute.xlu0 %317
        %319 = vrot.lane.b32.xlu0 %v290, 80
        %v320 = vpop.permute.xlu0 %319
        %323 = vrot.lane.b32.xlu0 %v287, 32
        %v324 = vpop.permute.xlu0 %323
        %325 = vrot.lane.b32.xlu0 %v310, 32
        %v326 = vpop.permute.xlu0 %325
        %327 = vrot.lane.b32.xlu0 %v290, 32
        %v328 = vpop.permute.xlu0 %327
        %329 = vrot.lane.b32.xlu0 %v313, 32
        %v330 = vpop.permute.xlu0 %329
        %v331 = vsel %vm262, %v324, %v326
        %v332 = vsel %vm262, %v328, %v330
        %333 = vrot.lane.b32.xlu0 %v310, 112
        %v334 = vpop.permute.xlu0 %333
        %335 = vrot.lane.b32.xlu0 %v313, 112
        %v336 = vpop.permute.xlu0 %335
        %337 = vrot.lane.b32.xlu0 %v287, 112
        %v338 = vpop.permute.xlu0 %337
        %339 = vrot.lane.b32.xlu0 %v290, 112
        %v340 = vpop.permute.xlu0 %339
        %vm341 = vcmask 130048
        %v342 = vsel %vm341, %v287, 0
        %v344 = vsel %vm341, %v290, 0
        %v346 = vsel %vm341, %v338, 0
        %v348 = vsel %vm341, %v340, 0
        %350 = vmatpush.xpose.msra.mxu0 0.0
        %351 = vmatpush.xpose.msra.mxu0 0.0
        %352 = vmatpush.xpose.msra.mxu0 0.0
        %353 = vmatpush.xpose.msra.mxu0 0.0
        %354 = vmatpush.xpose.msra.mxu0 0.0
        %355 = vmatpush.xpose.msra.mxu0 0.0
        %356 = vmatpush.xpose.msra.mxu0 0.0
        %357 = vmatpush.xpose.msra.mxu0 0.0
        %358 = vmatpush.xpose.msra.mxu0 0.0
        %359 = vmatpush.xpose.msra.mxu0 0.0
        %360 = vmatpush.xpose.msra.mxu0 0.0
        %361 = vmatpush.xpose.msra.mxu0 0.0
        %362 = vmatpush.xpose.msra.mxu0 0.0
        %363 = vmatpush.xpose.msra.mxu0 0.0
        %364 = vmatpush.xpose.msra.mxu0 %v348
        %365 = vmatpush.xpose.msra.mxu0 %v346
        %366 = vmatmul.f32.gmra.mxu0 %v342
        %v367 = vpop.f32.mrf.mxu0
        %v368 = vadd.f32 0.0, %v367
        %369 = vmatmul.f32.gmra.mxu0 %v344
        %v370 = vpop.f32.mrf.mxu0
        %v371 = vadd.f32 0.0, %v370
        %372 = vdwg.mxu0
        %373 = vrot.lane.b32.xlu0 %v318, 112
        %v374 = vpop.permute.xlu0 %373
        %375 = vrot.lane.b32.xlu0 %v320, 112
        %v376 = vpop.permute.xlu0 %375
        %v377 = vsel %vm341, %v318, 0
        %v379 = vsel %vm341, %v320, 0
        %v381 = vsel %vm341, %v374, 0
        %v383 = vsel %vm341, %v376, 0
        %385 = vmatpush.xpose.msra.mxu0 0.0
        %386 = vmatpush.xpose.msra.mxu0 0.0
        %387 = vmatpush.xpose.msra.mxu0 0.0
        %388 = vmatpush.xpose.msra.mxu0 0.0
        %389 = vmatpush.xpose.msra.mxu0 0.0
        %390 = vmatpush.xpose.msra.mxu0 0.0
        %391 = vmatpush.xpose.msra.mxu0 0.0
        %392 = vmatpush.xpose.msra.mxu0 0.0
        %393 = vmatpush.xpose.msra.mxu0 0.0
        %394 = vmatpush.xpose.msra.mxu0 0.0
        %395 = vmatpush.xpose.msra.mxu0 0.0
        %396 = vmatpush.xpose.msra.mxu0 0.0
        %397 = vmatpush.xpose.msra.mxu0 0.0
        %398 = vmatpush.xpose.msra.mxu0 0.0
        %399 = vmatpush.xpose.msra.mxu0 %v383
        %400 = vmatpush.xpose.msra.mxu0 %v381
        %401 = vmatmul.f32.gmra.mxu0 %v377
        %v402 = vpop.f32.mrf.mxu0
        %v403 = vadd.f32 0.0, %v402
        %404 = vmatmul.f32.gmra.mxu0 %v379
        %v405 = vpop.f32.mrf.mxu0
        %v406 = vadd.f32 0.0, %v405
        %407 = vdwg.mxu0
        %408 = vrot.lane.b32.xlu0 %v331, 112
        %v409 = vpop.permute.xlu0 %408
        %410 = vrot.lane.b32.xlu0 %v332, 112
        %v411 = vpop.permute.xlu0 %410
        %v412 = vsel %vm341, %v331, 0
        %v414 = vsel %vm341, %v332, 0
        %v416 = vsel %vm341, %v409, 0
        %v418 = vsel %vm341, %v411, 0
        %420 = vmatpush.xpose.msra.mxu0 0.0
        %421 = vmatpush.xpose.msra.mxu0 0.0
        %422 = vmatpush.xpose.msra.mxu0 0.0
        %423 = vmatpush.xpose.msra.mxu0 0.0
        %424 = vmatpush.xpose.msra.mxu0 0.0
        %425 = vmatpush.xpose.msra.mxu0 0.0
        %426 = vmatpush.xpose.msra.mxu0 0.0
        %427 = vmatpush.xpose.msra.mxu0 0.0
        %428 = vmatpush.xpose.msra.mxu0 0.0
        %429 = vmatpush.xpose.msra.mxu0 0.0
        %430 = vmatpush.xpose.msra.mxu0 0.0
        %431 = vmatpush.xpose.msra.mxu0 0.0
        %432 = vmatpush.xpose.msra.mxu0 0.0
        %433 = vmatpush.xpose.msra.mxu0 0.0
        %434 = vmatpush.xpose.msra.mxu0 %v418
        %435 = vmatpush.xpose.msra.mxu0 %v416
        %436 = vmatmul.f32.gmra.mxu0 %v412
        %v437 = vpop.f32.mrf.mxu0
        %v438 = vadd.f32 0.0, %v437
        %439 = vmatmul.f32.gmra.mxu0 %v414
        %v440 = vpop.f32.mrf.mxu0
        %v441 = vadd.f32 0.0, %v440
        %442 = vdwg.mxu0
        %443 = vrot.lane.b32.xlu0 %v334, 112
        %v444 = vpop.permute.xlu0 %443
        %445 = vrot.lane.b32.xlu0 %v336, 112
        %v446 = vpop.permute.xlu0 %445
        %v447 = vsel %vm341, %v334, 0
        %v449 = vsel %vm341, %v336, 0
        %v451 = vsel %vm341, %v444, 0
        %v453 = vsel %vm341, %v446, 0
        %455 = vmatpush.xpose.msra.mxu0 0.0
        %456 = vmatpush.xpose.msra.mxu0 0.0
        %457 = vmatpush.xpose.msra.mxu0 0.0
        %458 = vmatpush.xpose.msra.mxu0 0.0
        %459 = vmatpush.xpose.msra.mxu0 0.0
        %460 = vmatpush.xpose.msra.mxu0 0.0
        %461 = vmatpush.xpose.msra.mxu0 0.0
        %462 = vmatpush.xpose.msra.mxu0 0.0
        %463 = vmatpush.xpose.msra.mxu0 0.0
        %464 = vmatpush.xpose.msra.mxu0 0.0
        %465 = vmatpush.xpose.msra.mxu0 0.0
        %466 = vmatpush.xpose.msra.mxu0 0.0
        %467 = vmatpush.xpose.msra.mxu0 0.0
        %468 = vmatpush.xpose.msra.mxu0 0.0
        %469 = vmatpush.xpose.msra.mxu0 %v453
        %470 = vmatpush.xpose.msra.mxu0 %v451
        %471 = vmatmul.f32.gmra.mxu0 %v447
        %v472 = vpop.f32.mrf.mxu0
        %v473 = vadd.f32 0.0, %v472
        %474 = vmatmul.f32.gmra.mxu0 %v449
        %v475 = vpop.f32.mrf.mxu0
        %v476 = vadd.f32 0.0, %v475
        %477 = vdwg.mxu0
        %v478 = vsel %vm341, %v368, -inf
        %479 = vmax.xlane.f32.xlu0 %v478
        %v480 = vpop.xlane.xlu0 %479
        %v481 = vsel %vm341, %v371, -inf
        %482 = vmax.xlane.f32.xlu0 %v481
        %v483 = vpop.xlane.xlu0 %482
        %v484 = vsel %vm341, %v403, -inf
        %485 = vmax.xlane.f32.xlu0 %v484
        %v486 = vpop.xlane.xlu0 %485
        %v487 = vsel %vm341, %v406, -inf
        %488 = vmax.xlane.f32.xlu0 %v487
        %v489 = vpop.xlane.xlu0 %488
        %v490 = vsel %vm341, %v438, -inf
        %491 = vmax.xlane.f32.xlu0 %v490
        %v492 = vpop.xlane.xlu0 %491
        %v493 = vsel %vm341, %v441, -inf
        %494 = vmax.xlane.f32.xlu0 %v493
        %v495 = vpop.xlane.xlu0 %494
        %v496 = vsel %vm341, %v473, -inf
        %497 = vmax.xlane.f32.xlu0 %v496
        %v498 = vpop.xlane.xlu0 %497
        %v499 = vsel %vm341, %v476, -inf
        %500 = vmax.xlane.f32.xlu0 %v499
        %v501 = vpop.xlane.xlu0 %500
        %v502 = vsub.f32 %v368, %v480
        %v503 = vsub.f32 %v371, %v483
        %v504 = vsub.f32 %v403, %v486
        %v505 = vsub.f32 %v406, %v489
        %v506 = vsub.f32 %v438, %v492
        %v507 = vsub.f32 %v441, %v495
        %v508 = vsub.f32 %v473, %v498
        %v509 = vsub.f32 %v476, %v501
        %v510 = vmul.f32 %v502, 1.442695
        %v511 = vpow.pop %v510
        %v512 = vmul.f32 %v503, 1.442695
        %v513 = vpow.pop %v512
        %v514 = vmul.f32 %v504, 1.442695
        %v515 = vpow.pop %v514
        %v516 = vmul.f32 %v505, 1.442695
        %v517 = vpow.pop %v516
        %v518 = vmul.f32 %v506, 1.442695
        %v519 = vpow.pop %v518
        %v520 = vmul.f32 %v507, 1.442695
        %v521 = vpow.pop %v520
        %v522 = vmul.f32 %v508, 1.442695
        %v523 = vpow.pop %v522
        %v524 = vmul.f32 %v509, 1.442695
        %v525 = vpow.pop %v524
        %v526 = vsel %vm341, %v511, 0.0
        %527 = vadd.xlane.f32.xlu0 %v526
        %v528 = vpop.xlane.xlu0 %527
        %v529 = vsel %vm341, %v513, 0.0
        %530 = vadd.xlane.f32.xlu0 %v529
        %v531 = vpop.xlane.xlu0 %530
        %v532 = vsel %vm341, %v515, 0.0
        %533 = vadd.xlane.f32.xlu0 %v532
        %v534 = vpop.xlane.xlu0 %533
        %v535 = vsel %vm341, %v517, 0.0
        %536 = vadd.xlane.f32.xlu0 %v535
        %v537 = vpop.xlane.xlu0 %536
        %v538 = vsel %vm341, %v519, 0.0
        %539 = vadd.xlane.f32.xlu0 %v538
        %v540 = vpop.xlane.xlu0 %539
        %v541 = vsel %vm341, %v521, 0.0
        %542 = vadd.xlane.f32.xlu0 %v541
        %v543 = vpop.xlane.xlu0 %542
        %v544 = vsel %vm341, %v523, 0.0
        %545 = vadd.xlane.f32.xlu0 %v544
        %v546 = vpop.xlane.xlu0 %545
        %v547 = vsel %vm341, %v525, 0.0
        %548 = vadd.xlane.f32.xlu0 %v547
        %v549 = vpop.xlane.xlu0 %548
        %v550 = vrcp.pop %v528
        %v551 = vrcp.pop %v531
        %v552 = vrcp.pop %v534
        %v553 = vrcp.pop %v537
        %v554 = vrcp.pop %v540
        %v555 = vrcp.pop %v543
        %v556 = vrcp.pop %v546
        %v557 = vrcp.pop %v549
        %v558 = vmul.f32 %v511, %v550
        %v559 = vmul.f32 %v513, %v551
        %v560 = vmul.f32 %v515, %v552
        %v561 = vmul.f32 %v517, %v553
        %v562 = vmul.f32 %v519, %v554
        %v563 = vmul.f32 %v521, %v555
        %v564 = vmul.f32 %v523, %v556
        %v565 = vmul.f32 %v525, %v557
        %566 = vrot.lane.b32.xlu0 %v287, 96
        %v567 = vpop.permute.xlu0 %566
        %568 = vrot.lane.b32.xlu0 %v290, 96
        %v569 = vpop.permute.xlu0 %568
        %v573 = vsel %vm341, %v558, 0
        %v576 = vsel %vm341, %v559, 0
        %578 = vmatpush.msra.mxu0 0.0
        %579 = vmatpush.msra.mxu0 0.0
        %580 = vmatpush.msra.mxu0 0.0
        %581 = vmatpush.msra.mxu0 0.0
        %582 = vmatpush.msra.mxu0 0.0
        %583 = vmatpush.msra.mxu0 0.0
        %584 = vmatpush.msra.mxu0 0.0
        %585 = vmatpush.msra.mxu0 0.0
        %586 = vmatpush.msra.mxu0 0.0
        %587 = vmatpush.msra.mxu0 0.0
        %588 = vmatpush.msra.mxu0 0.0
        %589 = vmatpush.msra.mxu0 0.0
        %590 = vmatpush.msra.mxu0 0.0
        %591 = vmatpush.msra.mxu0 0.0
        %592 = vmatpush.msra.mxu0 %v569
        %593 = vmatpush.msra.mxu0 %v567
        %594 = vmatmul.f32.gmra.mxu0 %v573
        %v595 = vpop.f32.mrf.mxu0
        %v596 = vadd.f32 0.0, %v595
        %597 = vmatmul.f32.gmra.mxu0 %v576
        %v598 = vpop.f32.mrf.mxu0
        %v599 = vadd.f32 0.0, %v598
        %600 = vdwg.mxu0
        %601 = vrot.lane.b32.xlu0 %v318, 96
        %v602 = vpop.permute.xlu0 %601
        %603 = vrot.lane.b32.xlu0 %v320, 96
        %v604 = vpop.permute.xlu0 %603
        %v608 = vsel %vm341, %v560, 0
        %v611 = vsel %vm341, %v561, 0
        %613 = vmatpush.msra.mxu0 0.0
        %614 = vmatpush.msra.mxu0 0.0
        %615 = vmatpush.msra.mxu0 0.0
        %616 = vmatpush.msra.mxu0 0.0
        %617 = vmatpush.msra.mxu0 0.0
        %618 = vmatpush.msra.mxu0 0.0
        %619 = vmatpush.msra.mxu0 0.0
        %620 = vmatpush.msra.mxu0 0.0
        %621 = vmatpush.msra.mxu0 0.0
        %622 = vmatpush.msra.mxu0 0.0
        %623 = vmatpush.msra.mxu0 0.0
        %624 = vmatpush.msra.mxu0 0.0
        %625 = vmatpush.msra.mxu0 0.0
        %626 = vmatpush.msra.mxu0 0.0
        %627 = vmatpush.msra.mxu0 %v604
        %628 = vmatpush.msra.mxu0 %v602
        %629 = vmatmul.f32.gmra.mxu0 %v608
        %v630 = vpop.f32.mrf.mxu0
        %v631 = vadd.f32 0.0, %v630
        %632 = vmatmul.f32.gmra.mxu0 %v611
        %v633 = vpop.f32.mrf.mxu0
        %v634 = vadd.f32 0.0, %v633
        %635 = vdwg.mxu0
        %636 = vrot.lane.b32.xlu0 %v331, 96
        %v637 = vpop.permute.xlu0 %636
        %638 = vrot.lane.b32.xlu0 %v332, 96
        %v639 = vpop.permute.xlu0 %638
        %v643 = vsel %vm341, %v562, 0
        %v646 = vsel %vm341, %v563, 0
        %648 = vmatpush.msra.mxu0 0.0
        %649 = vmatpush.msra.mxu0 0.0
        %650 = vmatpush.msra.mxu0 0.0
        %651 = vmatpush.msra.mxu0 0.0
        %652 = vmatpush.msra.mxu0 0.0
        %653 = vmatpush.msra.mxu0 0.0
        %654 = vmatpush.msra.mxu0 0.0
        %655 = vmatpush.msra.mxu0 0.0
        %656 = vmatpush.msra.mxu0 0.0
        %657 = vmatpush.msra.mxu0 0.0
        %658 = vmatpush.msra.mxu0 0.0
        %659 = vmatpush.msra.mxu0 0.0
        %660 = vmatpush.msra.mxu0 0.0
        %661 = vmatpush.msra.mxu0 0.0
        %662 = vmatpush.msra.mxu0 %v639
        %663 = vmatpush.msra.mxu0 %v637
        %664 = vmatmul.f32.gmra.mxu0 %v643
        %v665 = vpop.f32.mrf.mxu0
        %v666 = vadd.f32 0.0, %v665
        %667 = vmatmul.f32.gmra.mxu0 %v646
        %v668 = vpop.f32.mrf.mxu0
        %v669 = vadd.f32 0.0, %v668
        %670 = vdwg.mxu0
        %671 = vrot.lane.b32.xlu0 %v334, 96
        %v672 = vpop.permute.xlu0 %671
        %673 = vrot.lane.b32.xlu0 %v336, 96
        %v674 = vpop.permute.xlu0 %673
        %v678 = vsel %vm341, %v564, 0
        %v681 = vsel %vm341, %v565, 0
        %683 = vmatpush.msra.mxu0 0.0
        %684 = vmatpush.msra.mxu0 0.0
        %685 = vmatpush.msra.mxu0 0.0
        %686 = vmatpush.msra.mxu0 0.0
        %687 = vmatpush.msra.mxu0 0.0
        %688 = vmatpush.msra.mxu0 0.0
        %689 = vmatpush.msra.mxu0 0.0
        %690 = vmatpush.msra.mxu0 0.0
        %691 = vmatpush.msra.mxu0 0.0
        %692 = vmatpush.msra.mxu0 0.0
        %693 = vmatpush.msra.mxu0 0.0
        %694 = vmatpush.msra.mxu0 0.0
        %695 = vmatpush.msra.mxu0 0.0
        %696 = vmatpush.msra.mxu0 0.0
        %697 = vmatpush.msra.mxu0 %v674
        %698 = vmatpush.msra.mxu0 %v672
        %699 = vmatmul.f32.gmra.mxu0 %v678
        %v700 = vpop.f32.mrf.mxu0
        %v701 = vadd.f32 0.0, %v700
        %702 = vmatmul.f32.gmra.mxu0 %v681
        %v703 = vpop.f32.mrf.mxu0
        %v704 = vadd.f32 0.0, %v703
        %705 = vdwg.mxu0
        %v706 = vld [vmem:[#allocation7] sm:$0xff]
        %v707 = vld [vmem:[#allocation7 + $0x8] sm:$0xff]
        %v708 = vld [vmem:[#allocation7 + $0x10] sm:$0xff]
        %v709 = vld [vmem:[#allocation7 + $0x18] sm:$0xff]
        %v710 = vld [vmem:[#allocation7 + $0x20] sm:$0xff]
        %v711 = vld [vmem:[#allocation7 + $0x28] sm:$0xff]
        %v712 = vld [vmem:[#allocation7 + $0x30] sm:$0xff]
        %v713 = vld [vmem:[#allocation7 + $0x38] sm:$0xff]
        %v715 = vsel %vm341, %v596, 0
        %v718 = vsel %vm341, %v599, 0
        %720 = vmatpush.msra.mxu0 0.0
        %721 = vmatpush.msra.mxu0 0.0
        %722 = vmatpush.msra.mxu0 0.0
        %723 = vmatpush.msra.mxu0 0.0
        %724 = vmatpush.msra.mxu0 0.0
        %725 = vmatpush.msra.mxu0 0.0
        %726 = vmatpush.msra.mxu0 0.0
        %727 = vmatpush.msra.mxu0 0.0
        %728 = vmatpush.msra.mxu0 0.0
        %729 = vmatpush.msra.mxu0 0.0
        %730 = vmatpush.msra.mxu0 0.0
        %731 = vmatpush.msra.mxu0 0.0
        %732 = vmatpush.msra.mxu0 0.0
        %733 = vmatpush.msra.mxu0 0.0
        %734 = vmatpush.msra.mxu0 %v707
        %735 = vmatpush.msra.mxu0 %v706
        %736 = vmatmul.f32.gmra.mxu0 %v715
        %v737 = vpop.f32.mrf.mxu0
        %v738 = vadd.f32 0.0, %v737
        %739 = vmatmul.f32.gmra.mxu0 %v718
        %v740 = vpop.f32.mrf.mxu0
        %v741 = vadd.f32 0.0, %v740
        %742 = vdwg.mxu0
        %v744 = vsel %vm341, %v631, 0
        %v747 = vsel %vm341, %v634, 0
        %749 = vmatpush.msra.mxu0 0.0
        %750 = vmatpush.msra.mxu0 0.0
        %751 = vmatpush.msra.mxu0 0.0
        %752 = vmatpush.msra.mxu0 0.0
        %753 = vmatpush.msra.mxu0 0.0
        %754 = vmatpush.msra.mxu0 0.0
        %755 = vmatpush.msra.mxu0 0.0
        %756 = vmatpush.msra.mxu0 0.0
        %757 = vmatpush.msra.mxu0 0.0
        %758 = vmatpush.msra.mxu0 0.0
        %759 = vmatpush.msra.mxu0 0.0
        %760 = vmatpush.msra.mxu0 0.0
        %761 = vmatpush.msra.mxu0 0.0
        %762 = vmatpush.msra.mxu0 0.0
        %763 = vmatpush.msra.mxu0 %v709
        %764 = vmatpush.msra.mxu0 %v708
        %765 = vmatmul.f32.gmra.mxu0 %v744
        %v766 = vpop.f32.mrf.mxu0
        %v767 = vadd.f32 0.0, %v766
        %768 = vmatmul.f32.gmra.mxu0 %v747
        %v769 = vpop.f32.mrf.mxu0
        %v770 = vadd.f32 0.0, %v769
        %771 = vdwg.mxu0
        %v773 = vsel %vm341, %v666, 0
        %v776 = vsel %vm341, %v669, 0
        %778 = vmatpush.msra.mxu0 0.0
        %779 = vmatpush.msra.mxu0 0.0
        %780 = vmatpush.msra.mxu0 0.0
        %781 = vmatpush.msra.mxu0 0.0
        %782 = vmatpush.msra.mxu0 0.0
        %783 = vmatpush.msra.mxu0 0.0
        %784 = vmatpush.msra.mxu0 0.0
        %785 = vmatpush.msra.mxu0 0.0
        %786 = vmatpush.msra.mxu0 0.0
        %787 = vmatpush.msra.mxu0 0.0
        %788 = vmatpush.msra.mxu0 0.0
        %789 = vmatpush.msra.mxu0 0.0
        %790 = vmatpush.msra.mxu0 0.0
        %791 = vmatpush.msra.mxu0 0.0
        %792 = vmatpush.msra.mxu0 %v711
        %793 = vmatpush.msra.mxu0 %v710
        %794 = vmatmul.f32.gmra.mxu0 %v773
        %v795 = vpop.f32.mrf.mxu0
        %v796 = vadd.f32 0.0, %v795
        %797 = vmatmul.f32.gmra.mxu0 %v776
        %v798 = vpop.f32.mrf.mxu0
        %v799 = vadd.f32 0.0, %v798
        %800 = vdwg.mxu0
        %v802 = vsel %vm341, %v701, 0
        %v805 = vsel %vm341, %v704, 0
        %807 = vmatpush.msra.mxu0 0.0
        %808 = vmatpush.msra.mxu0 0.0
        %809 = vmatpush.msra.mxu0 0.0
        %810 = vmatpush.msra.mxu0 0.0
        %811 = vmatpush.msra.mxu0 0.0
        %812 = vmatpush.msra.mxu0 0.0
        %813 = vmatpush.msra.mxu0 0.0
        %814 = vmatpush.msra.mxu0 0.0
        %815 = vmatpush.msra.mxu0 0.0
        %816 = vmatpush.msra.mxu0 0.0
        %817 = vmatpush.msra.mxu0 0.0
        %818 = vmatpush.msra.mxu0 0.0
        %819 = vmatpush.msra.mxu0 0.0
        %820 = vmatpush.msra.mxu0 0.0
        %821 = vmatpush.msra.mxu0 %v713
        %822 = vmatpush.msra.mxu0 %v712
        %823 = vmatmul.f32.gmra.mxu0 %v802
        %v824 = vpop.f32.mrf.mxu0
        %v825 = vadd.f32 0.0, %v824
        %826 = vmatmul.f32.gmra.mxu0 %v805
        %v827 = vpop.f32.mrf.mxu0
        %v828 = vadd.f32 0.0, %v827
        %829 = vdwg.mxu0
        %v830 = vadd.f32 %v738, %v767
        %v831 = vadd.f32 %v830, %v796
        %v832 = vadd.f32 %v831, %v825
        %v833 = vadd.f32 %v741, %v770
        %v834 = vadd.f32 %v833, %v799
        %v835 = vadd.f32 %v834, %v828
        %v836 = vld [vmem:[%s3] sm:$0x1]
        %v838 = vperm.slane %v836, 0
        %v840 = vadd.f32 %v832, %v838
        %v841 = vadd.f32 %v835, %v838
        %842 = vst [vmem:[%s250] sm:$0xff] %v840
        %843 = vst [vmem:[%s250 + $0x8] sm:$0xff] %v841
        %s844 = sand.u32 %s119, 1
        %s845 = scalar_lea.sflag [#allocation4], %s844
        %s846 = sand.u32 %s119, 1
        %s847 = smul.addr %s846, 16
        %s848 = scalar_lea.vmem [#allocation8], %s847
        // Predicated region
        $region49: #{tpu_custom_call.1} parent=35 // pred_check
          %p849 = pneg %p129
        $region50: #{tpu_custom_call.1} parent=35 // pred_check_branch
          %851 = sbr.rel (%p849) target = $region52
        $region51: #{tpu_custom_call.1} parent=35 // pred_region
          %853 = vsyncadd %s845, 0
          %s854 = smul.addr %s22, 2
          %s855 = smul.addr %s854, 8
          %s856 = scalar_lea.hbm %s4, %s855
          %s857 = sshll.u32 %s848, 4
          %s858 = int_to_ptr.vmem [resolvable:$true] %s857
          %s859 = sshll.u32 %s856, 4
          %s860 = int_to_ptr.hbm [resolvable:$true] %s859
          %865 = dma.vmem_to_hbm [thread:$0]  %s858, 256, %s860, %s845, 128, 128, 8
        $region52: #{tpu_custom_call.1} parent=35 // pred_fallthru
          _
      $region36: #{tpu_custom_call.1} parent=5 // pred_fallthru
        _
      %p866 = scmp.le.s32.totalorder 2, %s17
      // Predicated region
      $region53: #{tpu_custom_call.1} parent=5 // pred_check
        %p867 = pneg %p866
      $region54: #{tpu_custom_call.1} parent=5 // pred_check_branch
        %869 = sbr.rel (%p867) target = $region56
      $region55: #{tpu_custom_call.1} parent=5 // pred_region
        %s870 = ssub.s32 %s17, 2
        // Predicated region
        $region57: #{tpu_custom_call.1} parent=55 // pred_check
          %p871 = pneg %p135
        $region58: #{tpu_custom_call.1} parent=55 // pred_check_branch
          %873 = sbr.rel (%p871) target = $region60
        $region59: #{tpu_custom_call.1} parent=55 // pred_region
          %s874 = sand.u32 %s120, 1
          %s875 = scalar_lea.sflag [#allocation4], %s874
          %s876 = sand.u32 %s120, 1
          %s877 = smul.addr %s876, 16
          %s878 = scalar_lea.vmem [#allocation8], %s877
          %880 = dma.done %s875, 256
        $region60: #{tpu_custom_call.1} parent=55 // pred_fallthru
          _
      $region56: #{tpu_custom_call.1} parent=5 // pred_fallthru
        _
    $region6: #{tpu_custom_call.1} parent=1 // loop_footer
      %s21 = sadd.s32 1, %s17
    $region7: #{tpu_custom_call.1} parent=1 // loop_footer_branch
      %16 = sbr.rel target = $region3
    $region8: #{tpu_custom_call.1} parent=1 // loop_exit
      _
    %881 = vsyncpa [#allocation3], 1
    %s882 = scalar_lea.sflag [#allocation3], 1
    %883 = vsyncpa %s882, 1
    %884 = vsyncpa [#allocation6], 1
    %885 = vsyncpa [#allocation4], 1
    %s886 = scalar_lea.sflag [#allocation4], 1
    %887 = vsyncpa %s886, 1

</llo_original>
